<compile_context>
chip_gen: v5e
topology: v5e:2x2
jax: 0.10.0
libtpu: 0.0.40
codegen_flags: <defaults>
</compile_context>

<pallas_src>
import functools

import jax
import jax.numpy as jnp
from jax.experimental import pallas as pl
from jax.experimental.pallas import tpu as pltpu


def _lstm_kernel(x_ref, wih_ref, whh_ref, b_ref, out_ref,
                 h_scr, c_scr, xp_scr, *, unroll):
    """One grid step == CHUNK timesteps of the LSTM recurrence.

    x_ref   : (CHUNK*B, D)    bf16 input chunk, row index = t*B + b
    wih_ref : (D, 4H)         bf16 W_ih^T, i/f/o columns pre-scaled by 0.5
    whh_ref : (H, 4H)         bf16 W_hh^T, i/f/o columns pre-scaled by 0.5
    b_ref   : (1, 4H)         f32 (b_ih + b_hh), i/f/o pre-scaled by 0.5
    out_ref : (CHUNK, B, H)   f32 hidden states for this chunk
    h_scr   : (B, H)          f32 carry across grid steps - hidden state
    c_scr   : (B, H)          f32 carry across grid steps - cell state
    xp_scr  : (CHUNK, B, 4H)  f32 precomputed input projection
    """
    @pl.when(pl.program_id(0) == 0)
    def _():
        h_scr[...] = jnp.zeros_like(h_scr)
        c_scr[...] = jnp.zeros_like(c_scr)

    chunk, B, H = out_ref.shape

    # Batched input projection for the whole chunk, off the serial path:
    # one (CHUNK*B, D) @ (D, 4H) MXU matmul (good M occupancy) + bias add.
    xproj = jnp.dot(x_ref[...], wih_ref[...],
                    preferred_element_type=jnp.float32) + b_ref[...]
    xp_scr[...] = xproj.reshape(chunk, B, 4 * H)

    whh = whh_ref[...]  # resident bf16 recurrent weights for the whole chunk

    def step(t, carry):
        h_prev, c_prev = carry
        # Serial critical path: only the (B, H) @ (H, 4H) recurrent matmul.
        gates = xp_scr[t] + jnp.dot(h_prev.astype(whh.dtype), whh,
                                    preferred_element_type=jnp.float32)
        # i/f/o columns were pre-scaled by 0.5 in the wrapper, so
        # sigmoid(z) = 0.5*tanh(z/2)+0.5 becomes one tanh over the whole
        # (B, 4H) block plus a scale+shift on three of the four slices.
        tg = jnp.tanh(gates)
        i_g = 0.5 * tg[:, 0 * H:1 * H] + 0.5
        f_g = 0.5 * tg[:, 1 * H:2 * H] + 0.5
        g_g = tg[:, 2 * H:3 * H]
        o_g = 0.5 * tg[:, 3 * H:4 * H] + 0.5

        c_new = f_g * c_prev + i_g * g_g
        h_new = o_g * jnp.tanh(c_new)

        out_ref[t] = h_new.astype(out_ref.dtype)
        return (h_new, c_new)

    h_f, c_f = jax.lax.fori_loop(0, chunk, step, (h_scr[...], c_scr[...]),
                                 unroll=unroll)

    # Persist the recurrent state for the next grid step.
    h_scr[...] = h_f
    c_scr[...] = c_f


def lstm_forward(src, w_ih, w_hh, b_ih, b_hh, *, chunk=None):
    """src: (batch, seq, input_dim) f32.  Returns (batch, seq, hidden) f32."""
    batch, seq, in_dim = src.shape
    four_h = w_ih.shape[0]
    hidden = four_h // 4

    # Chunk policy: whole sequence in one grid step when small; cap for long
    # sequences.  (VMEM at these shapes is orders of magnitude below the
    # scoped limit on v5e/v6e/v7x; re-derive the cap if H/B/seq scale up.)
    if chunk is None:
        chunk = min(seq, 64)
    chunk = max(1, min(chunk, seq))
    n_chunks = pl.cdiv(seq, chunk)
    seq_pad = n_chunks * chunk

    # Time-major bf16 MXU operands; padded zero tail timesteps only affect
    # outputs that are sliced off below.
    x_tm = jnp.transpose(src, (1, 0, 2)).astype(jnp.bfloat16)
    if seq_pad != seq:
        x_tm = jnp.pad(x_tm, ((0, seq_pad - seq), (0, 0), (0, 0)))
    x2d = x_tm.reshape(seq_pad * batch, in_dim)   # row = t*batch + b

    # Fold the 0.5 sigmoid pre-scale into the i/f/o weight columns + bias
    # (PyTorch gate order i, f, g, o); g column stays unscaled for tanh.
    scale = jnp.concatenate([
        jnp.full((hidden,), 0.5, jnp.float32),
        jnp.full((hidden,), 0.5, jnp.float32),
        jnp.ones((hidden,), jnp.float32),
        jnp.full((hidden,), 0.5, jnp.float32)])
    w_ih_t = (w_ih.T.astype(jnp.float32) * scale[None, :]).astype(jnp.bfloat16)
    w_hh_t = (w_hh.T.astype(jnp.float32) * scale[None, :]).astype(jnp.bfloat16)
    bias = ((b_ih + b_hh).astype(jnp.float32) * scale).reshape(1, four_h)

    unroll = True if chunk <= 16 else 8

    out_tm = pl.pallas_call(
        functools.partial(_lstm_kernel, unroll=unroll),
        out_shape=jax.ShapeDtypeStruct((seq_pad, batch, hidden), jnp.float32),
        grid_spec=pltpu.PrefetchScalarGridSpec(
            num_scalar_prefetch=0,
            grid=(n_chunks,),
            in_specs=[
                pl.BlockSpec((chunk * batch, in_dim), lambda t: (t, 0)),
                pl.BlockSpec((in_dim, four_h), lambda t: (0, 0)),
                pl.BlockSpec((hidden, four_h), lambda t: (0, 0)),
                pl.BlockSpec((1, four_h), lambda t: (0, 0)),
            ],
            out_specs=pl.BlockSpec((chunk, batch, hidden),
                                   lambda t: (t, 0, 0)),
            scratch_shapes=[
                pltpu.VMEM((batch, hidden), jnp.float32),
                pltpu.VMEM((batch, hidden), jnp.float32),
                pltpu.VMEM((chunk, batch, four_h), jnp.float32),
            ],
        ),
        compiler_params=pltpu.CompilerParams(
            dimension_semantics=("arbitrary",),  # sequential recurrence carry
        ),
    )(x2d, w_ih_t, w_hh_t, bias)

    # Drop padding, back to batch-major (batch, seq, hidden).
    return jnp.transpose(out_tm[:seq], (1, 0, 2))


lstm_forward_jit = jax.jit(lstm_forward, static_argnames=("chunk",))


def _lstm_reference(src, w_ih, w_hh, b_ih, b_hh):
    """Pure-JAX f32 reference matching torch.nn.LSTM gate order (i, f, g, o)."""
    batch, _, _ = src.shape
    hidden = w_hh.shape[1]

    def step(carry, x_t):
        h, c = carry
        gates = x_t @ w_ih.T + b_ih + h @ w_hh.T + b_hh
        i_g, f_g, g_g, o_g = jnp.split(gates, 4, axis=-1)
        i_g = jax.nn.sigmoid(i_g)
        f_g = jax.nn.sigmoid(f_g)
        g_g = jnp.tanh(g_g)
        o_g = jax.nn.sigmoid(o_g)
        c = f_g * c + i_g * g_g
        h = o_g * jnp.tanh(c)
        return (h, c), h

    h0 = jnp.zeros((batch, hidden), jnp.float32)
    c0 = jnp.zeros((batch, hidden), jnp.float32)
    (_, _), hs = jax.lax.scan(step, (h0, c0), jnp.transpose(src, (1, 0, 2)))
    return jnp.transpose(hs, (1, 0, 2))


if __name__ == "__main__":
    # Small shapes consistent with an LSTM NER encoder.
    batch, seq, in_dim, hidden = 8, 16, 128, 128

    key = jax.random.PRNGKey(0)
    k_src, k_tgt, k_wih, k_whh, k_bih, k_bhh = jax.random.split(key, 6)

    src = jax.random.normal(k_src, (batch, seq, in_dim), jnp.float32)
    tgt = jax.random.normal(k_tgt, (batch, seq), jnp.float32)  # unused

    # Deterministic PyTorch-style LSTM init: U(-1/sqrt(H), 1/sqrt(H)).
    bound = 1.0 / jnp.sqrt(jnp.float32(hidden))
    w_ih = jax.random.uniform(k_wih, (4 * hidden, in_dim), jnp.float32,
                              -bound, bound)
    w_hh = jax.random.uniform(k_whh, (4 * hidden, hidden), jnp.float32,
                              -bound, bound)
    b_ih = jax.random.uniform(k_bih, (4 * hidden,), jnp.float32, -bound, bound)
    b_hh = jax.random.uniform(k_bhh, (4 * hidden,), jnp.float32, -bound, bound)

    ref = _lstm_reference(src, w_ih, w_hh, b_ih, b_hh)

    # Default chunk = full sequence (single grid step).
    out = lstm_forward_jit(src, w_ih, w_hh, b_ih, b_hh)
    jax.block_until_ready(out)
    assert out.shape == (batch, seq, hidden)
    # bf16 MXU operands -> looser tolerance than the pure-f32 version.
    assert jnp.allclose(out, ref, atol=5e-2, rtol=5e-2), "mismatch vs reference"

    # Also exercise the multi-chunk path (padding + h/c carry across grid
    # steps): seq=16 with chunk=6 -> 3 grid steps, 2 padded tail timesteps.
    out2 = lstm_forward_jit(src, w_ih, w_hh, b_ih, b_hh, chunk=6)
    jax.block_until_ready(out2)
    assert jnp.allclose(out2, ref, atol=5e-2, rtol=5e-2), "mismatch (chunked)"

    print("KERNEL_OK")
</pallas_src>

<mosaic_0001>
module attributes {stable_mosaic.version = 11 : i64} {
  func.func @_lstm_kernel(%arg0: i32, %arg1: memref<128x128xbf16, #tpu.memory_space<vmem>>, %arg2: memref<128x512xbf16, #tpu.memory_space<vmem>>, %arg3: memref<128x512xbf16, #tpu.memory_space<vmem>>, %arg4: memref<1x512xf32, #tpu.memory_space<vmem>>, %arg5: memref<16x8x128xf32, #tpu.memory_space<vmem>>, %arg6: memref<8x128xf32, #tpu.memory_space<vmem>>, %arg7: memref<8x128xf32, #tpu.memory_space<vmem>>, %arg8: memref<16x8x512xf32, #tpu.memory_space<vmem>>) attributes {dimension_semantics = [#tpu.dimension_semantics<arbitrary>], iteration_bounds = array<i64: 1>, scalar_prefetch = 0 : i64, scratch_operands = 3 : i64, tpu.core_type = #tpu.core_type<tc>, window_params = [{transform_indices = @transform_0, window_bounds = array<i64: 128, 128>}, {pipeline_mode = #tpu.pipeline_mode<synchronous>, transform_indices = @transform_1, window_bounds = array<i64: 128, 512>}, {pipeline_mode = #tpu.pipeline_mode<synchronous>, transform_indices = @transform_2, window_bounds = array<i64: 128, 512>}, {pipeline_mode = #tpu.pipeline_mode<synchronous>, transform_indices = @transform_3, window_bounds = array<i64: 1, 512>}, {transform_indices = @transform_4, window_bounds = array<i64: 16, 8, 128>}]} {
    %c0_i32 = arith.constant 0 : i32
    %0 = arith.cmpi eq, %arg0, %c0_i32 : i32
    %1 = arith.extui %0 : i1 to i32
    %c0_i32_0 = arith.constant 0 : i32
    %2 = arith.cmpi ne, %1, %c0_i32_0 : i32
    scf.if %2 {
      %cst_196 = arith.constant 0.000000e+00 : f32
      %528 = vector.broadcast %cst_196 : f32 to vector<8x128xf32>
      %c0_197 = arith.constant 0 : index
      %c0_198 = arith.constant 0 : index
      %529 = vector.load %arg6[%c0_197, %c0_198] : memref<8x128xf32, #tpu.memory_space<vmem>>, vector<8x128xf32>
      tpu.vector_store %arg6[%c0_197, %c0_198], %528 {strides = array<i32>} : memref<8x128xf32, #tpu.memory_space<vmem>>, vector<8x128xf32>,
      %cst_199 = arith.constant 0.000000e+00 : f32
      %530 = vector.broadcast %cst_199 : f32 to vector<8x128xf32>
      %c0_200 = arith.constant 0 : index
      %c0_201 = arith.constant 0 : index
      %531 = vector.load %arg7[%c0_200, %c0_201] : memref<8x128xf32, #tpu.memory_space<vmem>>, vector<8x128xf32>
      tpu.vector_store %arg7[%c0_200, %c0_201], %530 {strides = array<i32>} : memref<8x128xf32, #tpu.memory_space<vmem>>, vector<8x128xf32>,
    } else {
    }
    %c0 = arith.constant 0 : index
    %c0_1 = arith.constant 0 : index
    %3 = vector.load %arg1[%c0, %c0_1] : memref<128x128xbf16, #tpu.memory_space<vmem>>, vector<128x128xbf16>
    %c0_2 = arith.constant 0 : index
    %c0_3 = arith.constant 0 : index
    %4 = vector.load %arg2[%c0_2, %c0_3] : memref<128x512xbf16, #tpu.memory_space<vmem>>, vector<128x512xbf16>
    %cst = arith.constant dense<0.000000e+00> : vector<128x512xf32>
    %5 = tpu.matmul %3, %4, %cst {dimension_numbers = #tpu.dot_dimension_numbers<[1], [0], [0], [1], [0, 0, 1, 1], [], []>} : vector<128x128xbf16>, vector<128x512xbf16>, vector<128x512xf32> -> vector<128x512xf32>
    %c0_4 = arith.constant 0 : index
    %c0_5 = arith.constant 0 : index
    %6 = vector.load %arg4[%c0_4, %c0_5] : memref<1x512xf32, #tpu.memory_space<vmem>>, vector<1x512xf32>
    %7 = vector.broadcast %6 : vector<1x512xf32> to vector<128x512xf32>
    %8 = arith.addf %5, %7 : vector<128x512xf32>
    %9 = vector.shape_cast %8 : vector<128x512xf32> to vector<16x8x512xf32>
    %c0_6 = arith.constant 0 : index
    %c0_7 = arith.constant 0 : index
    %c0_8 = arith.constant 0 : index
    %10 = vector.load %arg8[%c0_6, %c0_7, %c0_8] : memref<16x8x512xf32, #tpu.memory_space<vmem>>, vector<16x8x512xf32>
    tpu.vector_store %arg8[%c0_6, %c0_7, %c0_8], %9 {strides = array<i32>} : memref<16x8x512xf32, #tpu.memory_space<vmem>>, vector<16x8x512xf32>,
    %c0_9 = arith.constant 0 : index
    %c0_10 = arith.constant 0 : index
    %11 = vector.load %arg3[%c0_9, %c0_10] : memref<128x512xbf16, #tpu.memory_space<vmem>>, vector<128x512xbf16>
    %c0_11 = arith.constant 0 : index
    %c0_12 = arith.constant 0 : index
    %12 = vector.load %arg6[%c0_11, %c0_12] : memref<8x128xf32, #tpu.memory_space<vmem>>, vector<8x128xf32>
    %c0_13 = arith.constant 0 : index
    %c0_14 = arith.constant 0 : index
    %13 = vector.load %arg7[%c0_13, %c0_14] : memref<8x128xf32, #tpu.memory_space<vmem>>, vector<8x128xf32>
    %c0_i32_15 = arith.constant 0 : i32
    %14 = arith.index_cast %c0_i32_15 : i32 to index
    %c0_16 = arith.constant 0 : index
    %c0_17 = arith.constant 0 : index
    %15 = vector.load %arg8[%14, %c0_16, %c0_17] : memref<16x8x512xf32, #tpu.memory_space<vmem>>, vector<1x8x512xf32>
    %16 = vector.shape_cast %15 : vector<1x8x512xf32> to vector<8x512xf32>
    %17 = arith.truncf %12 : vector<8x128xf32> to vector<8x128xbf16>
    %cst_18 = arith.constant dense<0.000000e+00> : vector<8x512xf32>
    %18 = tpu.matmul %17, %11, %cst_18 {dimension_numbers = #tpu.dot_dimension_numbers<[1], [0], [0], [1], [0, 0, 1, 1], [], []>} : vector<8x128xbf16>, vector<128x512xbf16>, vector<8x512xf32> -> vector<8x512xf32>
    %19 = arith.addf %16, %18 : vector<8x512xf32>
    %20 = math.tanh %19 : vector<8x512xf32>
    %21 = vector.extract_strided_slice %20 {offsets = [0, 0], sizes = [8, 128], strides = [1, 1]} : vector<8x512xf32> to vector<8x128xf32>
    %cst_19 = arith.constant 5.000000e-01 : f32
    %22 = vector.broadcast %cst_19 : f32 to vector<8x128xf32>
    %23 = arith.mulf %22, %21 : vector<8x128xf32>
    %cst_20 = arith.constant 5.000000e-01 : f32
    %24 = vector.broadcast %cst_20 : f32 to vector<8x128xf32>
    %25 = arith.addf %23, %24 : vector<8x128xf32>
    %26 = vector.extract_strided_slice %20 {offsets = [0, 128], sizes = [8, 128], strides = [1, 1]} : vector<8x512xf32> to vector<8x128xf32>
    %cst_21 = arith.constant 5.000000e-01 : f32
    %27 = vector.broadcast %cst_21 : f32 to vector<8x128xf32>
    %28 = arith.mulf %27, %26 : vector<8x128xf32>
    %cst_22 = arith.constant 5.000000e-01 : f32
    %29 = vector.broadcast %cst_22 : f32 to vector<8x128xf32>
    %30 = arith.addf %28, %29 : vector<8x128xf32>
    %31 = vector.extract_strided_slice %20 {offsets = [0, 256], sizes = [8, 128], strides = [1, 1]} : vector<8x512xf32> to vector<8x128xf32>
    %32 = vector.extract_strided_slice %20 {offsets = [0, 384], sizes = [8, 128], strides = [1, 1]} : vector<8x512xf32> to vector<8x128xf32>
    %cst_23 = arith.constant 5.000000e-01 : f32
    %33 = vector.broadcast %cst_23 : f32 to vector<8x128xf32>
    %34 = arith.mulf %33, %32 : vector<8x128xf32>
    %cst_24 = arith.constant 5.000000e-01 : f32
    %35 = vector.broadcast %cst_24 : f32 to vector<8x128xf32>
    %36 = arith.addf %34, %35 : vector<8x128xf32>
    %37 = arith.mulf %30, %13 : vector<8x128xf32>
    %38 = arith.mulf %25, %31 : vector<8x128xf32>
    %39 = arith.addf %37, %38 : vector<8x128xf32>
    %40 = math.tanh %39 : vector<8x128xf32>
    %41 = arith.mulf %36, %40 : vector<8x128xf32>
    %42 = arith.index_cast %c0_i32_15 : i32 to index
    %c0_25 = arith.constant 0 : index
    %c0_26 = arith.constant 0 : index
    %43 = vector.load %arg5[%42, %c0_25, %c0_26] : memref<16x8x128xf32, #tpu.memory_space<vmem>>, vector<1x8x128xf32>
    %44 = vector.shape_cast %43 : vector<1x8x128xf32> to vector<8x128xf32>
    %45 = vector.shape_cast %41 : vector<8x128xf32> to vector<1x8x128xf32>
    tpu.vector_store %arg5[%42, %c0_25, %c0_26], %45 {strides = array<i32>} : memref<16x8x128xf32, #tpu.memory_space<vmem>>, vector<1x8x128xf32>,
    %c1_i32 = arith.constant 1 : i32
    %46 = arith.index_cast %c1_i32 : i32 to index
    %c0_27 = arith.constant 0 : index
    %c0_28 = arith.constant 0 : index
    %47 = vector.load %arg8[%46, %c0_27, %c0_28] : memref<16x8x512xf32, #tpu.memory_space<vmem>>, vector<1x8x512xf32>
    %48 = vector.shape_cast %47 : vector<1x8x512xf32> to vector<8x512xf32>
    %49 = arith.truncf %41 : vector<8x128xf32> to vector<8x128xbf16>
    %cst_29 = arith.constant dense<0.000000e+00> : vector<8x512xf32>
    %50 = tpu.matmul %49, %11, %cst_29 {dimension_numbers = #tpu.dot_dimension_numbers<[1], [0], [0], [1], [0, 0, 1, 1], [], []>} : vector<8x128xbf16>, vector<128x512xbf16>, vector<8x512xf32> -> vector<8x512xf32>
    %51 = arith.addf %48, %50 : vector<8x512xf32>
    %52 = math.tanh %51 : vector<8x512xf32>
    %53 = vector.extract_strided_slice %52 {offsets = [0, 0], sizes = [8, 128], strides = [1, 1]} : vector<8x512xf32> to vector<8x128xf32>
    %cst_30 = arith.constant 5.000000e-01 : f32
    %54 = vector.broadcast %cst_30 : f32 to vector<8x128xf32>
    %55 = arith.mulf %54, %53 : vector<8x128xf32>
    %cst_31 = arith.constant 5.000000e-01 : f32
    %56 = vector.broadcast %cst_31 : f32 to vector<8x128xf32>
    %57 = arith.addf %55, %56 : vector<8x128xf32>
    %58 = vector.extract_strided_slice %52 {offsets = [0, 128], sizes = [8, 128], strides = [1, 1]} : vector<8x512xf32> to vector<8x128xf32>
    %cst_32 = arith.constant 5.000000e-01 : f32
    %59 = vector.broadcast %cst_32 : f32 to vector<8x128xf32>
    %60 = arith.mulf %59, %58 : vector<8x128xf32>
    %cst_33 = arith.constant 5.000000e-01 : f32
    %61 = vector.broadcast %cst_33 : f32 to vector<8x128xf32>
    %62 = arith.addf %60, %61 : vector<8x128xf32>
    %63 = vector.extract_strided_slice %52 {offsets = [0, 256], sizes = [8, 128], strides = [1, 1]} : vector<8x512xf32> to vector<8x128xf32>
    %64 = vector.extract_strided_slice %52 {offsets = [0, 384], sizes = [8, 128], strides = [1, 1]} : vector<8x512xf32> to vector<8x128xf32>
    %cst_34 = arith.constant 5.000000e-01 : f32
    %65 = vector.broadcast %cst_34 : f32 to vector<8x128xf32>
    %66 = arith.mulf %65, %64 : vector<8x128xf32>
    %cst_35 = arith.constant 5.000000e-01 : f32
    %67 = vector.broadcast %cst_35 : f32 to vector<8x128xf32>
    %68 = arith.addf %66, %67 : vector<8x128xf32>
    %69 = arith.mulf %62, %39 : vector<8x128xf32>
    %70 = arith.mulf %57, %63 : vector<8x128xf32>
    %71 = arith.addf %69, %70 : vector<8x128xf32>
    %72 = math.tanh %71 : vector<8x128xf32>
    %73 = arith.mulf %68, %72 : vector<8x128xf32>
    %74 = arith.index_cast %c1_i32 : i32 to index
    %c0_36 = arith.constant 0 : index
    %c0_37 = arith.constant 0 : index
    %75 = vector.load %arg5[%74, %c0_36, %c0_37] : memref<16x8x128xf32, #tpu.memory_space<vmem>>, vector<1x8x128xf32>
    %76 = vector.shape_cast %75 : vector<1x8x128xf32> to vector<8x128xf32>
    %77 = vector.shape_cast %73 : vector<8x128xf32> to vector<1x8x128xf32>
    tpu.vector_store %arg5[%74, %c0_36, %c0_37], %77 {strides = array<i32>} : memref<16x8x128xf32, #tpu.memory_space<vmem>>, vector<1x8x128xf32>,
    %c2_i32 = arith.constant 2 : i32
    %78 = arith.index_cast %c2_i32 : i32 to index
    %c0_38 = arith.constant 0 : index
    %c0_39 = arith.constant 0 : index
    %79 = vector.load %arg8[%78, %c0_38, %c0_39] : memref<16x8x512xf32, #tpu.memory_space<vmem>>, vector<1x8x512xf32>
    %80 = vector.shape_cast %79 : vector<1x8x512xf32> to vector<8x512xf32>
    %81 = arith.truncf %73 : vector<8x128xf32> to vector<8x128xbf16>
    %cst_40 = arith.constant dense<0.000000e+00> : vector<8x512xf32>
    %82 = tpu.matmul %81, %11, %cst_40 {dimension_numbers = #tpu.dot_dimension_numbers<[1], [0], [0], [1], [0, 0, 1, 1], [], []>} : vector<8x128xbf16>, vector<128x512xbf16>, vector<8x512xf32> -> vector<8x512xf32>
    %83 = arith.addf %80, %82 : vector<8x512xf32>
    %84 = math.tanh %83 : vector<8x512xf32>
    %85 = vector.extract_strided_slice %84 {offsets = [0, 0], sizes = [8, 128], strides = [1, 1]} : vector<8x512xf32> to vector<8x128xf32>
    %cst_41 = arith.constant 5.000000e-01 : f32
    %86 = vector.broadcast %cst_41 : f32 to vector<8x128xf32>
    %87 = arith.mulf %86, %85 : vector<8x128xf32>
    %cst_42 = arith.constant 5.000000e-01 : f32
    %88 = vector.broadcast %cst_42 : f32 to vector<8x128xf32>
    %89 = arith.addf %87, %88 : vector<8x128xf32>
    %90 = vector.extract_strided_slice %84 {offsets = [0, 128], sizes = [8, 128], strides = [1, 1]} : vector<8x512xf32> to vector<8x128xf32>
    %cst_43 = arith.constant 5.000000e-01 : f32
    %91 = vector.broadcast %cst_43 : f32 to vector<8x128xf32>
    %92 = arith.mulf %91, %90 : vector<8x128xf32>
    %cst_44 = arith.constant 5.000000e-01 : f32
    %93 = vector.broadcast %cst_44 : f32 to vector<8x128xf32>
    %94 = arith.addf %92, %93 : vector<8x128xf32>
    %95 = vector.extract_strided_slice %84 {offsets = [0, 256], sizes = [8, 128], strides = [1, 1]} : vector<8x512xf32> to vector<8x128xf32>
    %96 = vector.extract_strided_slice %84 {offsets = [0, 384], sizes = [8, 128], strides = [1, 1]} : vector<8x512xf32> to vector<8x128xf32>
    %cst_45 = arith.constant 5.000000e-01 : f32
    %97 = vector.broadcast %cst_45 : f32 to vector<8x128xf32>
    %98 = arith.mulf %97, %96 : vector<8x128xf32>
    %cst_46 = arith.constant 5.000000e-01 : f32
    %99 = vector.broadcast %cst_46 : f32 to vector<8x128xf32>
    %100 = arith.addf %98, %99 : vector<8x128xf32>
    %101 = arith.mulf %94, %71 : vector<8x128xf32>
    %102 = arith.mulf %89, %95 : vector<8x128xf32>
    %103 = arith.addf %101, %102 : vector<8x128xf32>
    %104 = math.tanh %103 : vector<8x128xf32>
    %105 = arith.mulf %100, %104 : vector<8x128xf32>
    %106 = arith.index_cast %c2_i32 : i32 to index
    %c0_47 = arith.constant 0 : index
    %c0_48 = arith.constant 0 : index
    %107 = vector.load %arg5[%106, %c0_47, %c0_48] : memref<16x8x128xf32, #tpu.memory_space<vmem>>, vector<1x8x128xf32>
    %108 = vector.shape_cast %107 : vector<1x8x128xf32> to vector<8x128xf32>
    %109 = vector.shape_cast %105 : vector<8x128xf32> to vector<1x8x128xf32>
    tpu.vector_store %arg5[%106, %c0_47, %c0_48], %109 {strides = array<i32>} : memref<16x8x128xf32, #tpu.memory_space<vmem>>, vector<1x8x128xf32>,
    %c3_i32 = arith.constant 3 : i32
    %110 = arith.index_cast %c3_i32 : i32 to index
    %c0_49 = arith.constant 0 : index
    %c0_50 = arith.constant 0 : index
    %111 = vector.load %arg8[%110, %c0_49, %c0_50] : memref<16x8x512xf32, #tpu.memory_space<vmem>>, vector<1x8x512xf32>
    %112 = vector.shape_cast %111 : vector<1x8x512xf32> to vector<8x512xf32>
    %113 = arith.truncf %105 : vector<8x128xf32> to vector<8x128xbf16>
    %cst_51 = arith.constant dense<0.000000e+00> : vector<8x512xf32>
    %114 = tpu.matmul %113, %11, %cst_51 {dimension_numbers = #tpu.dot_dimension_numbers<[1], [0], [0], [1], [0, 0, 1, 1], [], []>} : vector<8x128xbf16>, vector<128x512xbf16>, vector<8x512xf32> -> vector<8x512xf32>
    %115 = arith.addf %112, %114 : vector<8x512xf32>
    %116 = math.tanh %115 : vector<8x512xf32>
    %117 = vector.extract_strided_slice %116 {offsets = [0, 0], sizes = [8, 128], strides = [1, 1]} : vector<8x512xf32> to vector<8x128xf32>
    %cst_52 = arith.constant 5.000000e-01 : f32
    %118 = vector.broadcast %cst_52 : f32 to vector<8x128xf32>
    %119 = arith.mulf %118, %117 : vector<8x128xf32>
    %cst_53 = arith.constant 5.000000e-01 : f32
    %120 = vector.broadcast %cst_53 : f32 to vector<8x128xf32>
    %121 = arith.addf %119, %120 : vector<8x128xf32>
    %122 = vector.extract_strided_slice %116 {offsets = [0, 128], sizes = [8, 128], strides = [1, 1]} : vector<8x512xf32> to vector<8x128xf32>
    %cst_54 = arith.constant 5.000000e-01 : f32
    %123 = vector.broadcast %cst_54 : f32 to vector<8x128xf32>
    %124 = arith.mulf %123, %122 : vector<8x128xf32>
    %cst_55 = arith.constant 5.000000e-01 : f32
    %125 = vector.broadcast %cst_55 : f32 to vector<8x128xf32>
    %126 = arith.addf %124, %125 : vector<8x128xf32>
    %127 = vector.extract_strided_slice %116 {offsets = [0, 256], sizes = [8, 128], strides = [1, 1]} : vector<8x512xf32> to vector<8x128xf32>
    %128 = vector.extract_strided_slice %116 {offsets = [0, 384], sizes = [8, 128], strides = [1, 1]} : vector<8x512xf32> to vector<8x128xf32>
    %cst_56 = arith.constant 5.000000e-01 : f32
    %129 = vector.broadcast %cst_56 : f32 to vector<8x128xf32>
    %130 = arith.mulf %129, %128 : vector<8x128xf32>
    %cst_57 = arith.constant 5.000000e-01 : f32
    %131 = vector.broadcast %cst_57 : f32 to vector<8x128xf32>
    %132 = arith.addf %130, %131 : vector<8x128xf32>
    %133 = arith.mulf %126, %103 : vector<8x128xf32>
    %134 = arith.mulf %121, %127 : vector<8x128xf32>
    %135 = arith.addf %133, %134 : vector<8x128xf32>
    %136 = math.tanh %135 : vector<8x128xf32>
    %137 = arith.mulf %132, %136 : vector<8x128xf32>
    %138 = arith.index_cast %c3_i32 : i32 to index
    %c0_58 = arith.constant 0 : index
    %c0_59 = arith.constant 0 : index
    %139 = vector.load %arg5[%138, %c0_58, %c0_59] : memref<16x8x128xf32, #tpu.memory_space<vmem>>, vector<1x8x128xf32>
    %140 = vector.shape_cast %139 : vector<1x8x128xf32> to vector<8x128xf32>
    %141 = vector.shape_cast %137 : vector<8x128xf32> to vector<1x8x128xf32>
    tpu.vector_store %arg5[%138, %c0_58, %c0_59], %141 {strides = array<i32>} : memref<16x8x128xf32, #tpu.memory_space<vmem>>, vector<1x8x128xf32>,
    %c4_i32 = arith.constant 4 : i32
    %142 = arith.index_cast %c4_i32 : i32 to index
    %c0_60 = arith.constant 0 : index
    %c0_61 = arith.constant 0 : index
    %143 = vector.load %arg8[%142, %c0_60, %c0_61] : memref<16x8x512xf32, #tpu.memory_space<vmem>>, vector<1x8x512xf32>
    %144 = vector.shape_cast %143 : vector<1x8x512xf32> to vector<8x512xf32>
    %145 = arith.truncf %137 : vector<8x128xf32> to vector<8x128xbf16>
    %cst_62 = arith.constant dense<0.000000e+00> : vector<8x512xf32>
    %146 = tpu.matmul %145, %11, %cst_62 {dimension_numbers = #tpu.dot_dimension_numbers<[1], [0], [0], [1], [0, 0, 1, 1], [], []>} : vector<8x128xbf16>, vector<128x512xbf16>, vector<8x512xf32> -> vector<8x512xf32>
    %147 = arith.addf %144, %146 : vector<8x512xf32>
    %148 = math.tanh %147 : vector<8x512xf32>
    %149 = vector.extract_strided_slice %148 {offsets = [0, 0], sizes = [8, 128], strides = [1, 1]} : vector<8x512xf32> to vector<8x128xf32>
    %cst_63 = arith.constant 5.000000e-01 : f32
    %150 = vector.broadcast %cst_63 : f32 to vector<8x128xf32>
    %151 = arith.mulf %150, %149 : vector<8x128xf32>
    %cst_64 = arith.constant 5.000000e-01 : f32
    %152 = vector.broadcast %cst_64 : f32 to vector<8x128xf32>
    %153 = arith.addf %151, %152 : vector<8x128xf32>
    %154 = vector.extract_strided_slice %148 {offsets = [0, 128], sizes = [8, 128], strides = [1, 1]} : vector<8x512xf32> to vector<8x128xf32>
    %cst_65 = arith.constant 5.000000e-01 : f32
    %155 = vector.broadcast %cst_65 : f32 to vector<8x128xf32>
    %156 = arith.mulf %155, %154 : vector<8x128xf32>
    %cst_66 = arith.constant 5.000000e-01 : f32
    %157 = vector.broadcast %cst_66 : f32 to vector<8x128xf32>
    %158 = arith.addf %156, %157 : vector<8x128xf32>
    %159 = vector.extract_strided_slice %148 {offsets = [0, 256], sizes = [8, 128], strides = [1, 1]} : vector<8x512xf32> to vector<8x128xf32>
    %160 = vector.extract_strided_slice %148 {offsets = [0, 384], sizes = [8, 128], strides = [1, 1]} : vector<8x512xf32> to vector<8x128xf32>
    %cst_67 = arith.constant 5.000000e-01 : f32
    %161 = vector.broadcast %cst_67 : f32 to vector<8x128xf32>
    %162 = arith.mulf %161, %160 : vector<8x128xf32>
    %cst_68 = arith.constant 5.000000e-01 : f32
    %163 = vector.broadcast %cst_68 : f32 to vector<8x128xf32>
    %164 = arith.addf %162, %163 : vector<8x128xf32>
    %165 = arith.mulf %158, %135 : vector<8x128xf32>
    %166 = arith.mulf %153, %159 : vector<8x128xf32>
    %167 = arith.addf %165, %166 : vector<8x128xf32>
    %168 = math.tanh %167 : vector<8x128xf32>
    %169 = arith.mulf %164, %168 : vector<8x128xf32>
    %170 = arith.index_cast %c4_i32 : i32 to index
    %c0_69 = arith.constant 0 : index
    %c0_70 = arith.constant 0 : index
    %171 = vector.load %arg5[%170, %c0_69, %c0_70] : memref<16x8x128xf32, #tpu.memory_space<vmem>>, vector<1x8x128xf32>
    %172 = vector.shape_cast %171 : vector<1x8x128xf32> to vector<8x128xf32>
    %173 = vector.shape_cast %169 : vector<8x128xf32> to vector<1x8x128xf32>
    tpu.vector_store %arg5[%170, %c0_69, %c0_70], %173 {strides = array<i32>} : memref<16x8x128xf32, #tpu.memory_space<vmem>>, vector<1x8x128xf32>,
    %c5_i32 = arith.constant 5 : i32
    %174 = arith.index_cast %c5_i32 : i32 to index
    %c0_71 = arith.constant 0 : index
    %c0_72 = arith.constant 0 : index
    %175 = vector.load %arg8[%174, %c0_71, %c0_72] : memref<16x8x512xf32, #tpu.memory_space<vmem>>, vector<1x8x512xf32>
    %176 = vector.shape_cast %175 : vector<1x8x512xf32> to vector<8x512xf32>
    %177 = arith.truncf %169 : vector<8x128xf32> to vector<8x128xbf16>
    %cst_73 = arith.constant dense<0.000000e+00> : vector<8x512xf32>
    %178 = tpu.matmul %177, %11, %cst_73 {dimension_numbers = #tpu.dot_dimension_numbers<[1], [0], [0], [1], [0, 0, 1, 1], [], []>} : vector<8x128xbf16>, vector<128x512xbf16>, vector<8x512xf32> -> vector<8x512xf32>
    %179 = arith.addf %176, %178 : vector<8x512xf32>
    %180 = math.tanh %179 : vector<8x512xf32>
    %181 = vector.extract_strided_slice %180 {offsets = [0, 0], sizes = [8, 128], strides = [1, 1]} : vector<8x512xf32> to vector<8x128xf32>
    %cst_74 = arith.constant 5.000000e-01 : f32
    %182 = vector.broadcast %cst_74 : f32 to vector<8x128xf32>
    %183 = arith.mulf %182, %181 : vector<8x128xf32>
    %cst_75 = arith.constant 5.000000e-01 : f32
    %184 = vector.broadcast %cst_75 : f32 to vector<8x128xf32>
    %185 = arith.addf %183, %184 : vector<8x128xf32>
    %186 = vector.extract_strided_slice %180 {offsets = [0, 128], sizes = [8, 128], strides = [1, 1]} : vector<8x512xf32> to vector<8x128xf32>
    %cst_76 = arith.constant 5.000000e-01 : f32
    %187 = vector.broadcast %cst_76 : f32 to vector<8x128xf32>
    %188 = arith.mulf %187, %186 : vector<8x128xf32>
    %cst_77 = arith.constant 5.000000e-01 : f32
    %189 = vector.broadcast %cst_77 : f32 to vector<8x128xf32>
    %190 = arith.addf %188, %189 : vector<8x128xf32>
    %191 = vector.extract_strided_slice %180 {offsets = [0, 256], sizes = [8, 128], strides = [1, 1]} : vector<8x512xf32> to vector<8x128xf32>
    %192 = vector.extract_strided_slice %180 {offsets = [0, 384], sizes = [8, 128], strides = [1, 1]} : vector<8x512xf32> to vector<8x128xf32>
    %cst_78 = arith.constant 5.000000e-01 : f32
    %193 = vector.broadcast %cst_78 : f32 to vector<8x128xf32>
    %194 = arith.mulf %193, %192 : vector<8x128xf32>
    %cst_79 = arith.constant 5.000000e-01 : f32
    %195 = vector.broadcast %cst_79 : f32 to vector<8x128xf32>
    %196 = arith.addf %194, %195 : vector<8x128xf32>
    %197 = arith.mulf %190, %167 : vector<8x128xf32>
    %198 = arith.mulf %185, %191 : vector<8x128xf32>
    %199 = arith.addf %197, %198 : vector<8x128xf32>
    %200 = math.tanh %199 : vector<8x128xf32>
    %201 = arith.mulf %196, %200 : vector<8x128xf32>
    %202 = arith.index_cast %c5_i32 : i32 to index
    %c0_80 = arith.constant 0 : index
    %c0_81 = arith.constant 0 : index
    %203 = vector.load %arg5[%202, %c0_80, %c0_81] : memref<16x8x128xf32, #tpu.memory_space<vmem>>, vector<1x8x128xf32>
    %204 = vector.shape_cast %203 : vector<1x8x128xf32> to vector<8x128xf32>
    %205 = vector.shape_cast %201 : vector<8x128xf32> to vector<1x8x128xf32>
    tpu.vector_store %arg5[%202, %c0_80, %c0_81], %205 {strides = array<i32>} : memref<16x8x128xf32, #tpu.memory_space<vmem>>, vector<1x8x128xf32>,
    %c6_i32 = arith.constant 6 : i32
    %206 = arith.index_cast %c6_i32 : i32 to index
    %c0_82 = arith.constant 0 : index
    %c0_83 = arith.constant 0 : index
    %207 = vector.load %arg8[%206, %c0_82, %c0_83] : memref<16x8x512xf32, #tpu.memory_space<vmem>>, vector<1x8x512xf32>
    %208 = vector.shape_cast %207 : vector<1x8x512xf32> to vector<8x512xf32>
    %209 = arith.truncf %201 : vector<8x128xf32> to vector<8x128xbf16>
    %cst_84 = arith.constant dense<0.000000e+00> : vector<8x512xf32>
    %210 = tpu.matmul %209, %11, %cst_84 {dimension_numbers = #tpu.dot_dimension_numbers<[1], [0], [0], [1], [0, 0, 1, 1], [], []>} : vector<8x128xbf16>, vector<128x512xbf16>, vector<8x512xf32> -> vector<8x512xf32>
    %211 = arith.addf %208, %210 : vector<8x512xf32>
    %212 = math.tanh %211 : vector<8x512xf32>
    %213 = vector.extract_strided_slice %212 {offsets = [0, 0], sizes = [8, 128], strides = [1, 1]} : vector<8x512xf32> to vector<8x128xf32>
    %cst_85 = arith.constant 5.000000e-01 : f32
    %214 = vector.broadcast %cst_85 : f32 to vector<8x128xf32>
    %215 = arith.mulf %214, %213 : vector<8x128xf32>
    %cst_86 = arith.constant 5.000000e-01 : f32
    %216 = vector.broadcast %cst_86 : f32 to vector<8x128xf32>
    %217 = arith.addf %215, %216 : vector<8x128xf32>
    %218 = vector.extract_strided_slice %212 {offsets = [0, 128], sizes = [8, 128], strides = [1, 1]} : vector<8x512xf32> to vector<8x128xf32>
    %cst_87 = arith.constant 5.000000e-01 : f32
    %219 = vector.broadcast %cst_87 : f32 to vector<8x128xf32>
    %220 = arith.mulf %219, %218 : vector<8x128xf32>
    %cst_88 = arith.constant 5.000000e-01 : f32
    %221 = vector.broadcast %cst_88 : f32 to vector<8x128xf32>
    %222 = arith.addf %220, %221 : vector<8x128xf32>
    %223 = vector.extract_strided_slice %212 {offsets = [0, 256], sizes = [8, 128], strides = [1, 1]} : vector<8x512xf32> to vector<8x128xf32>
    %224 = vector.extract_strided_slice %212 {offsets = [0, 384], sizes = [8, 128], strides = [1, 1]} : vector<8x512xf32> to vector<8x128xf32>
    %cst_89 = arith.constant 5.000000e-01 : f32
    %225 = vector.broadcast %cst_89 : f32 to vector<8x128xf32>
    %226 = arith.mulf %225, %224 : vector<8x128xf32>
    %cst_90 = arith.constant 5.000000e-01 : f32
    %227 = vector.broadcast %cst_90 : f32 to vector<8x128xf32>
    %228 = arith.addf %226, %227 : vector<8x128xf32>
    %229 = arith.mulf %222, %199 : vector<8x128xf32>
    %230 = arith.mulf %217, %223 : vector<8x128xf32>
    %231 = arith.addf %229, %230 : vector<8x128xf32>
    %232 = math.tanh %231 : vector<8x128xf32>
    %233 = arith.mulf %228, %232 : vector<8x128xf32>
    %234 = arith.index_cast %c6_i32 : i32 to index
    %c0_91 = arith.constant 0 : index
    %c0_92 = arith.constant 0 : index
    %235 = vector.load %arg5[%234, %c0_91, %c0_92] : memref<16x8x128xf32, #tpu.memory_space<vmem>>, vector<1x8x128xf32>
    %236 = vector.shape_cast %235 : vector<1x8x128xf32> to vector<8x128xf32>
    %237 = vector.shape_cast %233 : vector<8x128xf32> to vector<1x8x128xf32>
    tpu.vector_store %arg5[%234, %c0_91, %c0_92], %237 {strides = array<i32>} : memref<16x8x128xf32, #tpu.memory_space<vmem>>, vector<1x8x128xf32>,
    %c7_i32 = arith.constant 7 : i32
    %238 = arith.index_cast %c7_i32 : i32 to index
    %c0_93 = arith.constant 0 : index
    %c0_94 = arith.constant 0 : index
    %239 = vector.load %arg8[%238, %c0_93, %c0_94] : memref<16x8x512xf32, #tpu.memory_space<vmem>>, vector<1x8x512xf32>
    %240 = vector.shape_cast %239 : vector<1x8x512xf32> to vector<8x512xf32>
    %241 = arith.truncf %233 : vector<8x128xf32> to vector<8x128xbf16>
    %cst_95 = arith.constant dense<0.000000e+00> : vector<8x512xf32>
    %242 = tpu.matmul %241, %11, %cst_95 {dimension_numbers = #tpu.dot_dimension_numbers<[1], [0], [0], [1], [0, 0, 1, 1], [], []>} : vector<8x128xbf16>, vector<128x512xbf16>, vector<8x512xf32> -> vector<8x512xf32>
    %243 = arith.addf %240, %242 : vector<8x512xf32>
    %244 = math.tanh %243 : vector<8x512xf32>
    %245 = vector.extract_strided_slice %244 {offsets = [0, 0], sizes = [8, 128], strides = [1, 1]} : vector<8x512xf32> to vector<8x128xf32>
    %cst_96 = arith.constant 5.000000e-01 : f32
    %246 = vector.broadcast %cst_96 : f32 to vector<8x128xf32>
    %247 = arith.mulf %246, %245 : vector<8x128xf32>
    %cst_97 = arith.constant 5.000000e-01 : f32
    %248 = vector.broadcast %cst_97 : f32 to vector<8x128xf32>
    %249 = arith.addf %247, %248 : vector<8x128xf32>
    %250 = vector.extract_strided_slice %244 {offsets = [0, 128], sizes = [8, 128], strides = [1, 1]} : vector<8x512xf32> to vector<8x128xf32>
    %cst_98 = arith.constant 5.000000e-01 : f32
    %251 = vector.broadcast %cst_98 : f32 to vector<8x128xf32>
    %252 = arith.mulf %251, %250 : vector<8x128xf32>
    %cst_99 = arith.constant 5.000000e-01 : f32
    %253 = vector.broadcast %cst_99 : f32 to vector<8x128xf32>
    %254 = arith.addf %252, %253 : vector<8x128xf32>
    %255 = vector.extract_strided_slice %244 {offsets = [0, 256], sizes = [8, 128], strides = [1, 1]} : vector<8x512xf32> to vector<8x128xf32>
    %256 = vector.extract_strided_slice %244 {offsets = [0, 384], sizes = [8, 128], strides = [1, 1]} : vector<8x512xf32> to vector<8x128xf32>
    %cst_100 = arith.constant 5.000000e-01 : f32
    %257 = vector.broadcast %cst_100 : f32 to vector<8x128xf32>
    %258 = arith.mulf %257, %256 : vector<8x128xf32>
    %cst_101 = arith.constant 5.000000e-01 : f32
    %259 = vector.broadcast %cst_101 : f32 to vector<8x128xf32>
    %260 = arith.addf %258, %259 : vector<8x128xf32>
    %261 = arith.mulf %254, %231 : vector<8x128xf32>
    %262 = arith.mulf %249, %255 : vector<8x128xf32>
    %263 = arith.addf %261, %262 : vector<8x128xf32>
    %264 = math.tanh %263 : vector<8x128xf32>
    %265 = arith.mulf %260, %264 : vector<8x128xf32>
    %266 = arith.index_cast %c7_i32 : i32 to index
    %c0_102 = arith.constant 0 : index
    %c0_103 = arith.constant 0 : index
    %267 = vector.load %arg5[%266, %c0_102, %c0_103] : memref<16x8x128xf32, #tpu.memory_space<vmem>>, vector<1x8x128xf32>
    %268 = vector.shape_cast %267 : vector<1x8x128xf32> to vector<8x128xf32>
    %269 = vector.shape_cast %265 : vector<8x128xf32> to vector<1x8x128xf32>
    tpu.vector_store %arg5[%266, %c0_102, %c0_103], %269 {strides = array<i32>} : memref<16x8x128xf32, #tpu.memory_space<vmem>>, vector<1x8x128xf32>,
    %c8_i32 = arith.constant 8 : i32
    %270 = arith.index_cast %c8_i32 : i32 to index
    %c0_104 = arith.constant 0 : index
    %c0_105 = arith.constant 0 : index
    %271 = vector.load %arg8[%270, %c0_104, %c0_105] : memref<16x8x512xf32, #tpu.memory_space<vmem>>, vector<1x8x512xf32>
    %272 = vector.shape_cast %271 : vector<1x8x512xf32> to vector<8x512xf32>
    %273 = arith.truncf %265 : vector<8x128xf32> to vector<8x128xbf16>
    %cst_106 = arith.constant dense<0.000000e+00> : vector<8x512xf32>
    %274 = tpu.matmul %273, %11, %cst_106 {dimension_numbers = #tpu.dot_dimension_numbers<[1], [0], [0], [1], [0, 0, 1, 1], [], []>} : vector<8x128xbf16>, vector<128x512xbf16>, vector<8x512xf32> -> vector<8x512xf32>
    %275 = arith.addf %272, %274 : vector<8x512xf32>
    %276 = math.tanh %275 : vector<8x512xf32>
    %277 = vector.extract_strided_slice %276 {offsets = [0, 0], sizes = [8, 128], strides = [1, 1]} : vector<8x512xf32> to vector<8x128xf32>
    %cst_107 = arith.constant 5.000000e-01 : f32
    %278 = vector.broadcast %cst_107 : f32 to vector<8x128xf32>
    %279 = arith.mulf %278, %277 : vector<8x128xf32>
    %cst_108 = arith.constant 5.000000e-01 : f32
    %280 = vector.broadcast %cst_108 : f32 to vector<8x128xf32>
    %281 = arith.addf %279, %280 : vector<8x128xf32>
    %282 = vector.extract_strided_slice %276 {offsets = [0, 128], sizes = [8, 128], strides = [1, 1]} : vector<8x512xf32> to vector<8x128xf32>
    %cst_109 = arith.constant 5.000000e-01 : f32
    %283 = vector.broadcast %cst_109 : f32 to vector<8x128xf32>
    %284 = arith.mulf %283, %282 : vector<8x128xf32>
    %cst_110 = arith.constant 5.000000e-01 : f32
    %285 = vector.broadcast %cst_110 : f32 to vector<8x128xf32>
    %286 = arith.addf %284, %285 : vector<8x128xf32>
    %287 = vector.extract_strided_slice %276 {offsets = [0, 256], sizes = [8, 128], strides = [1, 1]} : vector<8x512xf32> to vector<8x128xf32>
    %288 = vector.extract_strided_slice %276 {offsets = [0, 384], sizes = [8, 128], strides = [1, 1]} : vector<8x512xf32> to vector<8x128xf32>
    %cst_111 = arith.constant 5.000000e-01 : f32
    %289 = vector.broadcast %cst_111 : f32 to vector<8x128xf32>
    %290 = arith.mulf %289, %288 : vector<8x128xf32>
    %cst_112 = arith.constant 5.000000e-01 : f32
    %291 = vector.broadcast %cst_112 : f32 to vector<8x128xf32>
    %292 = arith.addf %290, %291 : vector<8x128xf32>
    %293 = arith.mulf %286, %263 : vector<8x128xf32>
    %294 = arith.mulf %281, %287 : vector<8x128xf32>
    %295 = arith.addf %293, %294 : vector<8x128xf32>
    %296 = math.tanh %295 : vector<8x128xf32>
    %297 = arith.mulf %292, %296 : vector<8x128xf32>
    %298 = arith.index_cast %c8_i32 : i32 to index
    %c0_113 = arith.constant 0 : index
    %c0_114 = arith.constant 0 : index
    %299 = vector.load %arg5[%298, %c0_113, %c0_114] : memref<16x8x128xf32, #tpu.memory_space<vmem>>, vector<1x8x128xf32>
    %300 = vector.shape_cast %299 : vector<1x8x128xf32> to vector<8x128xf32>
    %301 = vector.shape_cast %297 : vector<8x128xf32> to vector<1x8x128xf32>
    tpu.vector_store %arg5[%298, %c0_113, %c0_114], %301 {strides = array<i32>} : memref<16x8x128xf32, #tpu.memory_space<vmem>>, vector<1x8x128xf32>,
    %c9_i32 = arith.constant 9 : i32
    %302 = arith.index_cast %c9_i32 : i32 to index
    %c0_115 = arith.constant 0 : index
    %c0_116 = arith.constant 0 : index
    %303 = vector.load %arg8[%302, %c0_115, %c0_116] : memref<16x8x512xf32, #tpu.memory_space<vmem>>, vector<1x8x512xf32>
    %304 = vector.shape_cast %303 : vector<1x8x512xf32> to vector<8x512xf32>
    %305 = arith.truncf %297 : vector<8x128xf32> to vector<8x128xbf16>
    %cst_117 = arith.constant dense<0.000000e+00> : vector<8x512xf32>
    %306 = tpu.matmul %305, %11, %cst_117 {dimension_numbers = #tpu.dot_dimension_numbers<[1], [0], [0], [1], [0, 0, 1, 1], [], []>} : vector<8x128xbf16>, vector<128x512xbf16>, vector<8x512xf32> -> vector<8x512xf32>
    %307 = arith.addf %304, %306 : vector<8x512xf32>
    %308 = math.tanh %307 : vector<8x512xf32>
    %309 = vector.extract_strided_slice %308 {offsets = [0, 0], sizes = [8, 128], strides = [1, 1]} : vector<8x512xf32> to vector<8x128xf32>
    %cst_118 = arith.constant 5.000000e-01 : f32
    %310 = vector.broadcast %cst_118 : f32 to vector<8x128xf32>
    %311 = arith.mulf %310, %309 : vector<8x128xf32>
    %cst_119 = arith.constant 5.000000e-01 : f32
    %312 = vector.broadcast %cst_119 : f32 to vector<8x128xf32>
    %313 = arith.addf %311, %312 : vector<8x128xf32>
    %314 = vector.extract_strided_slice %308 {offsets = [0, 128], sizes = [8, 128], strides = [1, 1]} : vector<8x512xf32> to vector<8x128xf32>
    %cst_120 = arith.constant 5.000000e-01 : f32
    %315 = vector.broadcast %cst_120 : f32 to vector<8x128xf32>
    %316 = arith.mulf %315, %314 : vector<8x128xf32>
    %cst_121 = arith.constant 5.000000e-01 : f32
    %317 = vector.broadcast %cst_121 : f32 to vector<8x128xf32>
    %318 = arith.addf %316, %317 : vector<8x128xf32>
    %319 = vector.extract_strided_slice %308 {offsets = [0, 256], sizes = [8, 128], strides = [1, 1]} : vector<8x512xf32> to vector<8x128xf32>
    %320 = vector.extract_strided_slice %308 {offsets = [0, 384], sizes = [8, 128], strides = [1, 1]} : vector<8x512xf32> to vector<8x128xf32>
    %cst_122 = arith.constant 5.000000e-01 : f32
    %321 = vector.broadcast %cst_122 : f32 to vector<8x128xf32>
    %322 = arith.mulf %321, %320 : vector<8x128xf32>
    %cst_123 = arith.constant 5.000000e-01 : f32
    %323 = vector.broadcast %cst_123 : f32 to vector<8x128xf32>
    %324 = arith.addf %322, %323 : vector<8x128xf32>
    %325 = arith.mulf %318, %295 : vector<8x128xf32>
    %326 = arith.mulf %313, %319 : vector<8x128xf32>
    %327 = arith.addf %325, %326 : vector<8x128xf32>
    %328 = math.tanh %327 : vector<8x128xf32>
    %329 = arith.mulf %324, %328 : vector<8x128xf32>
    %330 = arith.index_cast %c9_i32 : i32 to index
    %c0_124 = arith.constant 0 : index
    %c0_125 = arith.constant 0 : index
    %331 = vector.load %arg5[%330, %c0_124, %c0_125] : memref<16x8x128xf32, #tpu.memory_space<vmem>>, vector<1x8x128xf32>
    %332 = vector.shape_cast %331 : vector<1x8x128xf32> to vector<8x128xf32>
    %333 = vector.shape_cast %329 : vector<8x128xf32> to vector<1x8x128xf32>
    tpu.vector_store %arg5[%330, %c0_124, %c0_125], %333 {strides = array<i32>} : memref<16x8x128xf32, #tpu.memory_space<vmem>>, vector<1x8x128xf32>,
    %c10_i32 = arith.constant 10 : i32
    %334 = arith.index_cast %c10_i32 : i32 to index
    %c0_126 = arith.constant 0 : index
    %c0_127 = arith.constant 0 : index
    %335 = vector.load %arg8[%334, %c0_126, %c0_127] : memref<16x8x512xf32, #tpu.memory_space<vmem>>, vector<1x8x512xf32>
    %336 = vector.shape_cast %335 : vector<1x8x512xf32> to vector<8x512xf32>
    %337 = arith.truncf %329 : vector<8x128xf32> to vector<8x128xbf16>
    %cst_128 = arith.constant dense<0.000000e+00> : vector<8x512xf32>
    %338 = tpu.matmul %337, %11, %cst_128 {dimension_numbers = #tpu.dot_dimension_numbers<[1], [0], [0], [1], [0, 0, 1, 1], [], []>} : vector<8x128xbf16>, vector<128x512xbf16>, vector<8x512xf32> -> vector<8x512xf32>
    %339 = arith.addf %336, %338 : vector<8x512xf32>
    %340 = math.tanh %339 : vector<8x512xf32>
    %341 = vector.extract_strided_slice %340 {offsets = [0, 0], sizes = [8, 128], strides = [1, 1]} : vector<8x512xf32> to vector<8x128xf32>
    %cst_129 = arith.constant 5.000000e-01 : f32
    %342 = vector.broadcast %cst_129 : f32 to vector<8x128xf32>
    %343 = arith.mulf %342, %341 : vector<8x128xf32>
    %cst_130 = arith.constant 5.000000e-01 : f32
    %344 = vector.broadcast %cst_130 : f32 to vector<8x128xf32>
    %345 = arith.addf %343, %344 : vector<8x128xf32>
    %346 = vector.extract_strided_slice %340 {offsets = [0, 128], sizes = [8, 128], strides = [1, 1]} : vector<8x512xf32> to vector<8x128xf32>
    %cst_131 = arith.constant 5.000000e-01 : f32
    %347 = vector.broadcast %cst_131 : f32 to vector<8x128xf32>
    %348 = arith.mulf %347, %346 : vector<8x128xf32>
    %cst_132 = arith.constant 5.000000e-01 : f32
    %349 = vector.broadcast %cst_132 : f32 to vector<8x128xf32>
    %350 = arith.addf %348, %349 : vector<8x128xf32>
    %351 = vector.extract_strided_slice %340 {offsets = [0, 256], sizes = [8, 128], strides = [1, 1]} : vector<8x512xf32> to vector<8x128xf32>
    %352 = vector.extract_strided_slice %340 {offsets = [0, 384], sizes = [8, 128], strides = [1, 1]} : vector<8x512xf32> to vector<8x128xf32>
    %cst_133 = arith.constant 5.000000e-01 : f32
    %353 = vector.broadcast %cst_133 : f32 to vector<8x128xf32>
    %354 = arith.mulf %353, %352 : vector<8x128xf32>
    %cst_134 = arith.constant 5.000000e-01 : f32
    %355 = vector.broadcast %cst_134 : f32 to vector<8x128xf32>
    %356 = arith.addf %354, %355 : vector<8x128xf32>
    %357 = arith.mulf %350, %327 : vector<8x128xf32>
    %358 = arith.mulf %345, %351 : vector<8x128xf32>
    %359 = arith.addf %357, %358 : vector<8x128xf32>
    %360 = math.tanh %359 : vector<8x128xf32>
    %361 = arith.mulf %356, %360 : vector<8x128xf32>
    %362 = arith.index_cast %c10_i32 : i32 to index
    %c0_135 = arith.constant 0 : index
    %c0_136 = arith.constant 0 : index
    %363 = vector.load %arg5[%362, %c0_135, %c0_136] : memref<16x8x128xf32, #tpu.memory_space<vmem>>, vector<1x8x128xf32>
    %364 = vector.shape_cast %363 : vector<1x8x128xf32> to vector<8x128xf32>
    %365 = vector.shape_cast %361 : vector<8x128xf32> to vector<1x8x128xf32>
    tpu.vector_store %arg5[%362, %c0_135, %c0_136], %365 {strides = array<i32>} : memref<16x8x128xf32, #tpu.memory_space<vmem>>, vector<1x8x128xf32>,
    %c11_i32 = arith.constant 11 : i32
    %366 = arith.index_cast %c11_i32 : i32 to index
    %c0_137 = arith.constant 0 : index
    %c0_138 = arith.constant 0 : index
    %367 = vector.load %arg8[%366, %c0_137, %c0_138] : memref<16x8x512xf32, #tpu.memory_space<vmem>>, vector<1x8x512xf32>
    %368 = vector.shape_cast %367 : vector<1x8x512xf32> to vector<8x512xf32>
    %369 = arith.truncf %361 : vector<8x128xf32> to vector<8x128xbf16>
    %cst_139 = arith.constant dense<0.000000e+00> : vector<8x512xf32>
    %370 = tpu.matmul %369, %11, %cst_139 {dimension_numbers = #tpu.dot_dimension_numbers<[1], [0], [0], [1], [0, 0, 1, 1], [], []>} : vector<8x128xbf16>, vector<128x512xbf16>, vector<8x512xf32> -> vector<8x512xf32>
    %371 = arith.addf %368, %370 : vector<8x512xf32>
    %372 = math.tanh %371 : vector<8x512xf32>
    %373 = vector.extract_strided_slice %372 {offsets = [0, 0], sizes = [8, 128], strides = [1, 1]} : vector<8x512xf32> to vector<8x128xf32>
    %cst_140 = arith.constant 5.000000e-01 : f32
    %374 = vector.broadcast %cst_140 : f32 to vector<8x128xf32>
    %375 = arith.mulf %374, %373 : vector<8x128xf32>
    %cst_141 = arith.constant 5.000000e-01 : f32
    %376 = vector.broadcast %cst_141 : f32 to vector<8x128xf32>
    %377 = arith.addf %375, %376 : vector<8x128xf32>
    %378 = vector.extract_strided_slice %372 {offsets = [0, 128], sizes = [8, 128], strides = [1, 1]} : vector<8x512xf32> to vector<8x128xf32>
    %cst_142 = arith.constant 5.000000e-01 : f32
    %379 = vector.broadcast %cst_142 : f32 to vector<8x128xf32>
    %380 = arith.mulf %379, %378 : vector<8x128xf32>
    %cst_143 = arith.constant 5.000000e-01 : f32
    %381 = vector.broadcast %cst_143 : f32 to vector<8x128xf32>
    %382 = arith.addf %380, %381 : vector<8x128xf32>
    %383 = vector.extract_strided_slice %372 {offsets = [0, 256], sizes = [8, 128], strides = [1, 1]} : vector<8x512xf32> to vector<8x128xf32>
    %384 = vector.extract_strided_slice %372 {offsets = [0, 384], sizes = [8, 128], strides = [1, 1]} : vector<8x512xf32> to vector<8x128xf32>
    %cst_144 = arith.constant 5.000000e-01 : f32
    %385 = vector.broadcast %cst_144 : f32 to vector<8x128xf32>
    %386 = arith.mulf %385, %384 : vector<8x128xf32>
    %cst_145 = arith.constant 5.000000e-01 : f32
    %387 = vector.broadcast %cst_145 : f32 to vector<8x128xf32>
    %388 = arith.addf %386, %387 : vector<8x128xf32>
    %389 = arith.mulf %382, %359 : vector<8x128xf32>
    %390 = arith.mulf %377, %383 : vector<8x128xf32>
    %391 = arith.addf %389, %390 : vector<8x128xf32>
    %392 = math.tanh %391 : vector<8x128xf32>
    %393 = arith.mulf %388, %392 : vector<8x128xf32>
    %394 = arith.index_cast %c11_i32 : i32 to index
    %c0_146 = arith.constant 0 : index
    %c0_147 = arith.constant 0 : index
    %395 = vector.load %arg5[%394, %c0_146, %c0_147] : memref<16x8x128xf32, #tpu.memory_space<vmem>>, vector<1x8x128xf32>
    %396 = vector.shape_cast %395 : vector<1x8x128xf32> to vector<8x128xf32>
    %397 = vector.shape_cast %393 : vector<8x128xf32> to vector<1x8x128xf32>
    tpu.vector_store %arg5[%394, %c0_146, %c0_147], %397 {strides = array<i32>} : memref<16x8x128xf32, #tpu.memory_space<vmem>>, vector<1x8x128xf32>,
    %c12_i32 = arith.constant 12 : i32
    %398 = arith.index_cast %c12_i32 : i32 to index
    %c0_148 = arith.constant 0 : index
    %c0_149 = arith.constant 0 : index
    %399 = vector.load %arg8[%398, %c0_148, %c0_149] : memref<16x8x512xf32, #tpu.memory_space<vmem>>, vector<1x8x512xf32>
    %400 = vector.shape_cast %399 : vector<1x8x512xf32> to vector<8x512xf32>
    %401 = arith.truncf %393 : vector<8x128xf32> to vector<8x128xbf16>
    %cst_150 = arith.constant dense<0.000000e+00> : vector<8x512xf32>
    %402 = tpu.matmul %401, %11, %cst_150 {dimension_numbers = #tpu.dot_dimension_numbers<[1], [0], [0], [1], [0, 0, 1, 1], [], []>} : vector<8x128xbf16>, vector<128x512xbf16>, vector<8x512xf32> -> vector<8x512xf32>
    %403 = arith.addf %400, %402 : vector<8x512xf32>
    %404 = math.tanh %403 : vector<8x512xf32>
    %405 = vector.extract_strided_slice %404 {offsets = [0, 0], sizes = [8, 128], strides = [1, 1]} : vector<8x512xf32> to vector<8x128xf32>
    %cst_151 = arith.constant 5.000000e-01 : f32
    %406 = vector.broadcast %cst_151 : f32 to vector<8x128xf32>
    %407 = arith.mulf %406, %405 : vector<8x128xf32>
    %cst_152 = arith.constant 5.000000e-01 : f32
    %408 = vector.broadcast %cst_152 : f32 to vector<8x128xf32>
    %409 = arith.addf %407, %408 : vector<8x128xf32>
    %410 = vector.extract_strided_slice %404 {offsets = [0, 128], sizes = [8, 128], strides = [1, 1]} : vector<8x512xf32> to vector<8x128xf32>
    %cst_153 = arith.constant 5.000000e-01 : f32
    %411 = vector.broadcast %cst_153 : f32 to vector<8x128xf32>
    %412 = arith.mulf %411, %410 : vector<8x128xf32>
    %cst_154 = arith.constant 5.000000e-01 : f32
    %413 = vector.broadcast %cst_154 : f32 to vector<8x128xf32>
    %414 = arith.addf %412, %413 : vector<8x128xf32>
    %415 = vector.extract_strided_slice %404 {offsets = [0, 256], sizes = [8, 128], strides = [1, 1]} : vector<8x512xf32> to vector<8x128xf32>
    %416 = vector.extract_strided_slice %404 {offsets = [0, 384], sizes = [8, 128], strides = [1, 1]} : vector<8x512xf32> to vector<8x128xf32>
    %cst_155 = arith.constant 5.000000e-01 : f32
    %417 = vector.broadcast %cst_155 : f32 to vector<8x128xf32>
    %418 = arith.mulf %417, %416 : vector<8x128xf32>
    %cst_156 = arith.constant 5.000000e-01 : f32
    %419 = vector.broadcast %cst_156 : f32 to vector<8x128xf32>
    %420 = arith.addf %418, %419 : vector<8x128xf32>
    %421 = arith.mulf %414, %391 : vector<8x128xf32>
    %422 = arith.mulf %409, %415 : vector<8x128xf32>
    %423 = arith.addf %421, %422 : vector<8x128xf32>
    %424 = math.tanh %423 : vector<8x128xf32>
    %425 = arith.mulf %420, %424 : vector<8x128xf32>
    %426 = arith.index_cast %c12_i32 : i32 to index
    %c0_157 = arith.constant 0 : index
    %c0_158 = arith.constant 0 : index
    %427 = vector.load %arg5[%426, %c0_157, %c0_158] : memref<16x8x128xf32, #tpu.memory_space<vmem>>, vector<1x8x128xf32>
    %428 = vector.shape_cast %427 : vector<1x8x128xf32> to vector<8x128xf32>
    %429 = vector.shape_cast %425 : vector<8x128xf32> to vector<1x8x128xf32>
    tpu.vector_store %arg5[%426, %c0_157, %c0_158], %429 {strides = array<i32>} : memref<16x8x128xf32, #tpu.memory_space<vmem>>, vector<1x8x128xf32>,
    %c13_i32 = arith.constant 13 : i32
    %430 = arith.index_cast %c13_i32 : i32 to index
    %c0_159 = arith.constant 0 : index
    %c0_160 = arith.constant 0 : index
    %431 = vector.load %arg8[%430, %c0_159, %c0_160] : memref<16x8x512xf32, #tpu.memory_space<vmem>>, vector<1x8x512xf32>
    %432 = vector.shape_cast %431 : vector<1x8x512xf32> to vector<8x512xf32>
    %433 = arith.truncf %425 : vector<8x128xf32> to vector<8x128xbf16>
    %cst_161 = arith.constant dense<0.000000e+00> : vector<8x512xf32>
    %434 = tpu.matmul %433, %11, %cst_161 {dimension_numbers = #tpu.dot_dimension_numbers<[1], [0], [0], [1], [0, 0, 1, 1], [], []>} : vector<8x128xbf16>, vector<128x512xbf16>, vector<8x512xf32> -> vector<8x512xf32>
    %435 = arith.addf %432, %434 : vector<8x512xf32>
    %436 = math.tanh %435 : vector<8x512xf32>
    %437 = vector.extract_strided_slice %436 {offsets = [0, 0], sizes = [8, 128], strides = [1, 1]} : vector<8x512xf32> to vector<8x128xf32>
    %cst_162 = arith.constant 5.000000e-01 : f32
    %438 = vector.broadcast %cst_162 : f32 to vector<8x128xf32>
    %439 = arith.mulf %438, %437 : vector<8x128xf32>
    %cst_163 = arith.constant 5.000000e-01 : f32
    %440 = vector.broadcast %cst_163 : f32 to vector<8x128xf32>
    %441 = arith.addf %439, %440 : vector<8x128xf32>
    %442 = vector.extract_strided_slice %436 {offsets = [0, 128], sizes = [8, 128], strides = [1, 1]} : vector<8x512xf32> to vector<8x128xf32>
    %cst_164 = arith.constant 5.000000e-01 : f32
    %443 = vector.broadcast %cst_164 : f32 to vector<8x128xf32>
    %444 = arith.mulf %443, %442 : vector<8x128xf32>
    %cst_165 = arith.constant 5.000000e-01 : f32
    %445 = vector.broadcast %cst_165 : f32 to vector<8x128xf32>
    %446 = arith.addf %444, %445 : vector<8x128xf32>
    %447 = vector.extract_strided_slice %436 {offsets = [0, 256], sizes = [8, 128], strides = [1, 1]} : vector<8x512xf32> to vector<8x128xf32>
    %448 = vector.extract_strided_slice %436 {offsets = [0, 384], sizes = [8, 128], strides = [1, 1]} : vector<8x512xf32> to vector<8x128xf32>
    %cst_166 = arith.constant 5.000000e-01 : f32
    %449 = vector.broadcast %cst_166 : f32 to vector<8x128xf32>
    %450 = arith.mulf %449, %448 : vector<8x128xf32>
    %cst_167 = arith.constant 5.000000e-01 : f32
    %451 = vector.broadcast %cst_167 : f32 to vector<8x128xf32>
    %452 = arith.addf %450, %451 : vector<8x128xf32>
    %453 = arith.mulf %446, %423 : vector<8x128xf32>
    %454 = arith.mulf %441, %447 : vector<8x128xf32>
    %455 = arith.addf %453, %454 : vector<8x128xf32>
    %456 = math.tanh %455 : vector<8x128xf32>
    %457 = arith.mulf %452, %456 : vector<8x128xf32>
    %458 = arith.index_cast %c13_i32 : i32 to index
    %c0_168 = arith.constant 0 : index
    %c0_169 = arith.constant 0 : index
    %459 = vector.load %arg5[%458, %c0_168, %c0_169] : memref<16x8x128xf32, #tpu.memory_space<vmem>>, vector<1x8x128xf32>
    %460 = vector.shape_cast %459 : vector<1x8x128xf32> to vector<8x128xf32>
    %461 = vector.shape_cast %457 : vector<8x128xf32> to vector<1x8x128xf32>
    tpu.vector_store %arg5[%458, %c0_168, %c0_169], %461 {strides = array<i32>} : memref<16x8x128xf32, #tpu.memory_space<vmem>>, vector<1x8x128xf32>,
    %c14_i32 = arith.constant 14 : i32
    %462 = arith.index_cast %c14_i32 : i32 to index
    %c0_170 = arith.constant 0 : index
    %c0_171 = arith.constant 0 : index
    %463 = vector.load %arg8[%462, %c0_170, %c0_171] : memref<16x8x512xf32, #tpu.memory_space<vmem>>, vector<1x8x512xf32>
    %464 = vector.shape_cast %463 : vector<1x8x512xf32> to vector<8x512xf32>
    %465 = arith.truncf %457 : vector<8x128xf32> to vector<8x128xbf16>
    %cst_172 = arith.constant dense<0.000000e+00> : vector<8x512xf32>
    %466 = tpu.matmul %465, %11, %cst_172 {dimension_numbers = #tpu.dot_dimension_numbers<[1], [0], [0], [1], [0, 0, 1, 1], [], []>} : vector<8x128xbf16>, vector<128x512xbf16>, vector<8x512xf32> -> vector<8x512xf32>
    %467 = arith.addf %464, %466 : vector<8x512xf32>
    %468 = math.tanh %467 : vector<8x512xf32>
    %469 = vector.extract_strided_slice %468 {offsets = [0, 0], sizes = [8, 128], strides = [1, 1]} : vector<8x512xf32> to vector<8x128xf32>
    %cst_173 = arith.constant 5.000000e-01 : f32
    %470 = vector.broadcast %cst_173 : f32 to vector<8x128xf32>
    %471 = arith.mulf %470, %469 : vector<8x128xf32>
    %cst_174 = arith.constant 5.000000e-01 : f32
    %472 = vector.broadcast %cst_174 : f32 to vector<8x128xf32>
    %473 = arith.addf %471, %472 : vector<8x128xf32>
    %474 = vector.extract_strided_slice %468 {offsets = [0, 128], sizes = [8, 128], strides = [1, 1]} : vector<8x512xf32> to vector<8x128xf32>
    %cst_175 = arith.constant 5.000000e-01 : f32
    %475 = vector.broadcast %cst_175 : f32 to vector<8x128xf32>
    %476 = arith.mulf %475, %474 : vector<8x128xf32>
    %cst_176 = arith.constant 5.000000e-01 : f32
    %477 = vector.broadcast %cst_176 : f32 to vector<8x128xf32>
    %478 = arith.addf %476, %477 : vector<8x128xf32>
    %479 = vector.extract_strided_slice %468 {offsets = [0, 256], sizes = [8, 128], strides = [1, 1]} : vector<8x512xf32> to vector<8x128xf32>
    %480 = vector.extract_strided_slice %468 {offsets = [0, 384], sizes = [8, 128], strides = [1, 1]} : vector<8x512xf32> to vector<8x128xf32>
    %cst_177 = arith.constant 5.000000e-01 : f32
    %481 = vector.broadcast %cst_177 : f32 to vector<8x128xf32>
    %482 = arith.mulf %481, %480 : vector<8x128xf32>
    %cst_178 = arith.constant 5.000000e-01 : f32
    %483 = vector.broadcast %cst_178 : f32 to vector<8x128xf32>
    %484 = arith.addf %482, %483 : vector<8x128xf32>
    %485 = arith.mulf %478, %455 : vector<8x128xf32>
    %486 = arith.mulf %473, %479 : vector<8x128xf32>
    %487 = arith.addf %485, %486 : vector<8x128xf32>
    %488 = math.tanh %487 : vector<8x128xf32>
    %489 = arith.mulf %484, %488 : vector<8x128xf32>
    %490 = arith.index_cast %c14_i32 : i32 to index
    %c0_179 = arith.constant 0 : index
    %c0_180 = arith.constant 0 : index
    %491 = vector.load %arg5[%490, %c0_179, %c0_180] : memref<16x8x128xf32, #tpu.memory_space<vmem>>, vector<1x8x128xf32>
    %492 = vector.shape_cast %491 : vector<1x8x128xf32> to vector<8x128xf32>
    %493 = vector.shape_cast %489 : vector<8x128xf32> to vector<1x8x128xf32>
    tpu.vector_store %arg5[%490, %c0_179, %c0_180], %493 {strides = array<i32>} : memref<16x8x128xf32, #tpu.memory_space<vmem>>, vector<1x8x128xf32>,
    %c15_i32 = arith.constant 15 : i32
    %494 = arith.index_cast %c15_i32 : i32 to index
    %c0_181 = arith.constant 0 : index
    %c0_182 = arith.constant 0 : index
    %495 = vector.load %arg8[%494, %c0_181, %c0_182] : memref<16x8x512xf32, #tpu.memory_space<vmem>>, vector<1x8x512xf32>
    %496 = vector.shape_cast %495 : vector<1x8x512xf32> to vector<8x512xf32>
    %497 = arith.truncf %489 : vector<8x128xf32> to vector<8x128xbf16>
    %cst_183 = arith.constant dense<0.000000e+00> : vector<8x512xf32>
    %498 = tpu.matmul %497, %11, %cst_183 {dimension_numbers = #tpu.dot_dimension_numbers<[1], [0], [0], [1], [0, 0, 1, 1], [], []>} : vector<8x128xbf16>, vector<128x512xbf16>, vector<8x512xf32> -> vector<8x512xf32>
    %499 = arith.addf %496, %498 : vector<8x512xf32>
    %500 = math.tanh %499 : vector<8x512xf32>
    %501 = vector.extract_strided_slice %500 {offsets = [0, 0], sizes = [8, 128], strides = [1, 1]} : vector<8x512xf32> to vector<8x128xf32>
    %cst_184 = arith.constant 5.000000e-01 : f32
    %502 = vector.broadcast %cst_184 : f32 to vector<8x128xf32>
    %503 = arith.mulf %502, %501 : vector<8x128xf32>
    %cst_185 = arith.constant 5.000000e-01 : f32
    %504 = vector.broadcast %cst_185 : f32 to vector<8x128xf32>
    %505 = arith.addf %503, %504 : vector<8x128xf32>
    %506 = vector.extract_strided_slice %500 {offsets = [0, 128], sizes = [8, 128], strides = [1, 1]} : vector<8x512xf32> to vector<8x128xf32>
    %cst_186 = arith.constant 5.000000e-01 : f32
    %507 = vector.broadcast %cst_186 : f32 to vector<8x128xf32>
    %508 = arith.mulf %507, %506 : vector<8x128xf32>
    %cst_187 = arith.constant 5.000000e-01 : f32
    %509 = vector.broadcast %cst_187 : f32 to vector<8x128xf32>
    %510 = arith.addf %508, %509 : vector<8x128xf32>
    %511 = vector.extract_strided_slice %500 {offsets = [0, 256], sizes = [8, 128], strides = [1, 1]} : vector<8x512xf32> to vector<8x128xf32>
    %512 = vector.extract_strided_slice %500 {offsets = [0, 384], sizes = [8, 128], strides = [1, 1]} : vector<8x512xf32> to vector<8x128xf32>
    %cst_188 = arith.constant 5.000000e-01 : f32
    %513 = vector.broadcast %cst_188 : f32 to vector<8x128xf32>
    %514 = arith.mulf %513, %512 : vector<8x128xf32>
    %cst_189 = arith.constant 5.000000e-01 : f32
    %515 = vector.broadcast %cst_189 : f32 to vector<8x128xf32>
    %516 = arith.addf %514, %515 : vector<8x128xf32>
    %517 = arith.mulf %510, %487 : vector<8x128xf32>
    %518 = arith.mulf %505, %511 : vector<8x128xf32>
    %519 = arith.addf %517, %518 : vector<8x128xf32>
    %520 = math.tanh %519 : vector<8x128xf32>
    %521 = arith.mulf %516, %520 : vector<8x128xf32>
    %522 = arith.index_cast %c15_i32 : i32 to index
    %c0_190 = arith.constant 0 : index
    %c0_191 = arith.constant 0 : index
    %523 = vector.load %arg5[%522, %c0_190, %c0_191] : memref<16x8x128xf32, #tpu.memory_space<vmem>>, vector<1x8x128xf32>
    %524 = vector.shape_cast %523 : vector<1x8x128xf32> to vector<8x128xf32>
    %525 = vector.shape_cast %521 : vector<8x128xf32> to vector<1x8x128xf32>
    tpu.vector_store %arg5[%522, %c0_190, %c0_191], %525 {strides = array<i32>} : memref<16x8x128xf32, #tpu.memory_space<vmem>>, vector<1x8x128xf32>,
    %c16_i32 = arith.constant 16 : i32
    %c0_192 = arith.constant 0 : index
    %c0_193 = arith.constant 0 : index
    %526 = vector.load %arg6[%c0_192, %c0_193] : memref<8x128xf32, #tpu.memory_space<vmem>>, vector<8x128xf32>
    tpu.vector_store %arg6[%c0_192, %c0_193], %521 {strides = array<i32>} : memref<8x128xf32, #tpu.memory_space<vmem>>, vector<8x128xf32>,
    %c0_194 = arith.constant 0 : index
    %c0_195 = arith.constant 0 : index
    %527 = vector.load %arg7[%c0_194, %c0_195] : memref<8x128xf32, #tpu.memory_space<vmem>>, vector<8x128xf32>
    tpu.vector_store %arg7[%c0_194, %c0_195], %519 {strides = array<i32>} : memref<8x128xf32, #tpu.memory_space<vmem>>, vector<8x128xf32>,
    return
  }
  func.func @transform_0(%arg0: i32) -> (i32, i32) {
    %c0_i32 = arith.constant 0 : i32
    %c0_i32_0 = arith.constant 0 : i32
    return %arg0, %c0_i32 : i32, i32
  }
  func.func @transform_1(%arg0: i32) -> (i32, i32) {
    %c0_i32 = arith.constant 0 : i32
    %c0_i32_0 = arith.constant 0 : i32
    %c0_i32_1 = arith.constant 0 : i32
    return %c0_i32, %c0_i32_0 : i32, i32
  }
  func.func @transform_2(%arg0: i32) -> (i32, i32) {
    %c0_i32 = arith.constant 0 : i32
    %c0_i32_0 = arith.constant 0 : i32
    %c0_i32_1 = arith.constant 0 : i32
    return %c0_i32, %c0_i32_0 : i32, i32
  }
  func.func @transform_3(%arg0: i32) -> (i32, i32) {
    %c0_i32 = arith.constant 0 : i32
    %c0_i32_0 = arith.constant 0 : i32
    %c0_i32_1 = arith.constant 0 : i32
    return %c0_i32, %c0_i32_0 : i32, i32
  }
  func.func @transform_4(%arg0: i32) -> (i32, i32, i32) {
    %c0_i32 = arith.constant 0 : i32
    %c0_i32_0 = arith.constant 0 : i32
    %c0_i32_1 = arith.constant 0 : i32
    return %arg0, %c0_i32, %c0_i32_0 : i32, i32, i32
  }
}

</mosaic_0001>

<llo_original>
// kernel: lstm_forward.1
$region0: #{lstm_forward.1}
  #allocation0 [shape = 'u32[]', space=smem, size = 0x4, offset = 0x4, fixed_abs, tag = 'smem constant byte address 0x4 - core index']
  #allocation1 [shape = 'u32[72,128]{1,0:T(1,128)}', space=vmem, size = 0x9000, scoped, tag = 'internal scratch']
  #allocation2 [shape = 'f32[8,128]{1,0:T(8,128)}', space=vmem, size = 0x1000, scoped, tag = 'scratch operand']
  #allocation3 [shape = 'f32[8,128]{1,0:T(8,128)}', space=vmem, size = 0x1000, scoped, tag = 'scratch operand']
  #allocation4 [shape = 'f32[16,8,512]{2,1,0:T(8,128)}', space=vmem, size = 0x40000, scoped, tag = 'scratch operand']
  %s0 = inlined_call_operand.vmem [shape: bf16[128,128], index: 0, kind: input, shape index: {}]
  %s1 = inlined_call_operand.vmem [shape: bf16[128,512], index: 1, kind: input, shape index: {}]
  %s2 = inlined_call_operand.vmem [shape: bf16[128,512], index: 2, kind: input, shape index: {}]
  %s3 = inlined_call_operand.vmem [shape: f32[1,512], index: 3, kind: input, shape index: {}]
  %s4 = inlined_call_operand.vmem [shape: f32[16,8,128], index: 4, kind: output, shape index: {}]
  %s5 = sld [smem:[#allocation0]]
  $region30: #{lstm_forward.1} parent=0
    _
  %s7 = ssub.s32 1, %s5
  %s8 = scalar_select 0, %s7, %s5
  // Predicated region
  $region2: #{lstm_forward.1} parent=0 // pred_check
    _
  $region3: #{lstm_forward.1} parent=0 // pred_check_branch
    %10 = sbr.rel (0) target = $region5
  $region4: #{lstm_forward.1} parent=0 // pred_region
    _
  $region5: #{lstm_forward.1} parent=0 // pred_fallthru
    _
  // Predicated region
  $region6: #{lstm_forward.1} parent=0 // pred_check
    _
  $region7: #{lstm_forward.1} parent=0 // pred_check_branch
    %12 = sbr.rel (0) target = $region9
  $region8: #{lstm_forward.1} parent=0 // pred_region
    _
  $region9: #{lstm_forward.1} parent=0 // pred_fallthru
    _
  // Predicated region
  $region10: #{lstm_forward.1} parent=0 // pred_check
    _
  $region11: #{lstm_forward.1} parent=0 // pred_check_branch
    %14 = sbr.rel (0) target = $region13
  $region12: #{lstm_forward.1} parent=0 // pred_region
    _
  $region13: #{lstm_forward.1} parent=0 // pred_fallthru
    _
  // Predicated region
  $region14: #{lstm_forward.1} parent=0 // pred_check
    _
  $region15: #{lstm_forward.1} parent=0 // pred_check_branch
    %16 = sbr.rel (0) target = $region17
  $region16: #{lstm_forward.1} parent=0 // pred_region
    _
  $region17: #{lstm_forward.1} parent=0 // pred_fallthru
    _
  %p17 = scmp.eq.s32.totalorder 0, 0
  // Predicated region
  $region18: #{lstm_forward.1} parent=0 // pred_check
    %p18 = pneg %p17
  $region19: #{lstm_forward.1} parent=0 // pred_check_branch
    %20 = sbr.rel (%p18) target = $region21
  $region20: #{lstm_forward.1} parent=0 // pred_region
    %21 = vst [vmem:[#allocation2] sm:$0xff] 0.0
    %22 = vst [vmem:[#allocation3] sm:$0xff] 0.0
  $region21: #{lstm_forward.1} parent=0 // pred_fallthru
    _
  %v23 = vld [vmem:[%s0] sm:$0xf]
  %v24 = vld [vmem:[%s0 + $0x4] sm:$0xf]
  %v25 = vld [vmem:[%s0 + $0x8] sm:$0xf]
  %v26 = vld [vmem:[%s0 + $0xc] sm:$0xf]
  %v27 = vld [vmem:[%s0 + $0x10] sm:$0xf]
  %v28 = vld [vmem:[%s0 + $0x14] sm:$0xf]
  %v29 = vld [vmem:[%s0 + $0x18] sm:$0xf]
  %v30 = vld [vmem:[%s0 + $0x1c] sm:$0xf]
  %v31 = vld [vmem:[%s0 + $0x20] sm:$0xf]
  %v32 = vld [vmem:[%s0 + $0x24] sm:$0xf]
  %v33 = vld [vmem:[%s0 + $0x28] sm:$0xf]
  %v34 = vld [vmem:[%s0 + $0x2c] sm:$0xf]
  %v35 = vld [vmem:[%s0 + $0x30] sm:$0xf]
  %v36 = vld [vmem:[%s0 + $0x34] sm:$0xf]
  %v37 = vld [vmem:[%s0 + $0x38] sm:$0xf]
  %v38 = vld [vmem:[%s0 + $0x3c] sm:$0xf]
  %v39 = vld [vmem:[%s1] sm:$0xff]
  %v40 = vld [vmem:[%s1 + $0x8] sm:$0xff]
  %v41 = vld [vmem:[%s1 + $0x10] sm:$0xff]
  %v42 = vld [vmem:[%s1 + $0x18] sm:$0xff]
  %v43 = vld [vmem:[%s1 + $0x20] sm:$0xff]
  %v44 = vld [vmem:[%s1 + $0x28] sm:$0xff]
  %v45 = vld [vmem:[%s1 + $0x30] sm:$0xff]
  %v46 = vld [vmem:[%s1 + $0x38] sm:$0xff]
  %v47 = vld [vmem:[%s1 + $0x40] sm:$0xff]
  %v48 = vld [vmem:[%s1 + $0x48] sm:$0xff]
  %v49 = vld [vmem:[%s1 + $0x50] sm:$0xff]
  %v50 = vld [vmem:[%s1 + $0x58] sm:$0xff]
  %v51 = vld [vmem:[%s1 + $0x60] sm:$0xff]
  %v52 = vld [vmem:[%s1 + $0x68] sm:$0xff]
  %v53 = vld [vmem:[%s1 + $0x70] sm:$0xff]
  %v54 = vld [vmem:[%s1 + $0x78] sm:$0xff]
  %v55 = vld [vmem:[%s1 + $0x80] sm:$0xff]
  %v56 = vld [vmem:[%s1 + $0x88] sm:$0xff]
  %v57 = vld [vmem:[%s1 + $0x90] sm:$0xff]
  %v58 = vld [vmem:[%s1 + $0x98] sm:$0xff]
  %v59 = vld [vmem:[%s1 + $0xa0] sm:$0xff]
  %v60 = vld [vmem:[%s1 + $0xa8] sm:$0xff]
  %v61 = vld [vmem:[%s1 + $0xb0] sm:$0xff]
  %v62 = vld [vmem:[%s1 + $0xb8] sm:$0xff]
  %v63 = vld [vmem:[%s1 + $0xc0] sm:$0xff]
  %v64 = vld [vmem:[%s1 + $0xc8] sm:$0xff]
  %v65 = vld [vmem:[%s1 + $0xd0] sm:$0xff]
  %v66 = vld [vmem:[%s1 + $0xd8] sm:$0xff]
  %v67 = vld [vmem:[%s1 + $0xe0] sm:$0xff]
  %v68 = vld [vmem:[%s1 + $0xe8] sm:$0xff]
  %v69 = vld [vmem:[%s1 + $0xf0] sm:$0xff]
  %v70 = vld [vmem:[%s1 + $0xf8] sm:$0xff]
  %v71 = vld [vmem:[%s3] sm:$0xf]
  %v73 = vperm.slane %v71, 0
  %v74 = vperm.slane %v71, 1
  %v75 = vperm.slane %v71, 2
  %v76 = vperm.slane %v71, 3
  %v97 = vunpack.c.l.b16 %v23
  %v98 = vunpack.c.l.b16 %v24
  %v99 = vunpack.c.l.b16 %v25
  %v100 = vunpack.c.l.b16 %v26
  %v101 = vunpack.c.l.b16 %v27
  %v102 = vunpack.c.l.b16 %v28
  %v103 = vunpack.c.l.b16 %v29
  %v104 = vunpack.c.l.b16 %v30
  %v105 = vunpack.c.l.b16 %v31
  %v106 = vunpack.c.l.b16 %v32
  %v107 = vunpack.c.l.b16 %v33
  %v108 = vunpack.c.l.b16 %v34
  %v109 = vunpack.c.l.b16 %v35
  %v110 = vunpack.c.l.b16 %v36
  %v111 = vunpack.c.l.b16 %v37
  %v112 = vunpack.c.l.b16 %v38
  %v113 = vpack.c.b16 %v98, %v97
  %v114 = vpack.c.b16 %v100, %v99
  %v115 = vpack.c.b16 %v102, %v101
  %v116 = vpack.c.b16 %v104, %v103
  %v117 = vpack.c.b16 %v106, %v105
  %v118 = vpack.c.b16 %v108, %v107
  %v119 = vpack.c.b16 %v110, %v109
  %v120 = vpack.c.b16 %v112, %v111
  %v161 = vunpack.c.l.b16 %v39
  %v162 = vunpack.c.h.b16 %v39
  %v163 = vunpack.c.l.b16 %v40
  %v164 = vunpack.c.h.b16 %v40
  %v165 = vunpack.c.l.b16 %v41
  %v166 = vunpack.c.h.b16 %v41
  %v167 = vunpack.c.l.b16 %v42
  %v168 = vunpack.c.h.b16 %v42
  %v169 = vunpack.c.l.b16 %v43
  %v170 = vunpack.c.h.b16 %v43
  %v171 = vunpack.c.l.b16 %v44
  %v172 = vunpack.c.h.b16 %v44
  %v173 = vunpack.c.l.b16 %v45
  %v174 = vunpack.c.h.b16 %v45
  %v175 = vunpack.c.l.b16 %v46
  %v176 = vunpack.c.h.b16 %v46
  %v177 = vunpack.c.l.b16 %v47
  %v178 = vunpack.c.h.b16 %v47
  %v179 = vunpack.c.l.b16 %v48
  %v180 = vunpack.c.h.b16 %v48
  %v181 = vunpack.c.l.b16 %v49
  %v182 = vunpack.c.h.b16 %v49
  %v183 = vunpack.c.l.b16 %v50
  %v184 = vunpack.c.h.b16 %v50
  %v185 = vunpack.c.l.b16 %v51
  %v186 = vunpack.c.h.b16 %v51
  %v187 = vunpack.c.l.b16 %v52
  %v188 = vunpack.c.h.b16 %v52
  %v189 = vunpack.c.l.b16 %v53
  %v190 = vunpack.c.h.b16 %v53
  %v191 = vunpack.c.l.b16 %v54
  %v192 = vunpack.c.h.b16 %v54
  %v193 = vunpack.c.l.b16 %v55
  %v194 = vunpack.c.h.b16 %v55
  %v195 = vunpack.c.l.b16 %v56
  %v196 = vunpack.c.h.b16 %v56
  %v197 = vunpack.c.l.b16 %v57
  %v198 = vunpack.c.h.b16 %v57
  %v199 = vunpack.c.l.b16 %v58
  %v200 = vunpack.c.h.b16 %v58
  %v201 = vunpack.c.l.b16 %v59
  %v202 = vunpack.c.h.b16 %v59
  %v203 = vunpack.c.l.b16 %v60
  %v204 = vunpack.c.h.b16 %v60
  %v205 = vunpack.c.l.b16 %v61
  %v206 = vunpack.c.h.b16 %v61
  %v207 = vunpack.c.l.b16 %v62
  %v208 = vunpack.c.h.b16 %v62
  %v209 = vunpack.c.l.b16 %v63
  %v210 = vunpack.c.h.b16 %v63
  %v211 = vunpack.c.l.b16 %v64
  %v212 = vunpack.c.h.b16 %v64
  %v213 = vunpack.c.l.b16 %v65
  %v214 = vunpack.c.h.b16 %v65
  %v215 = vunpack.c.l.b16 %v66
  %v216 = vunpack.c.h.b16 %v66
  %v217 = vunpack.c.l.b16 %v67
  %v218 = vunpack.c.h.b16 %v67
  %v219 = vunpack.c.l.b16 %v68
  %v220 = vunpack.c.h.b16 %v68
  %v221 = vunpack.c.l.b16 %v69
  %v222 = vunpack.c.h.b16 %v69
  %v223 = vunpack.c.l.b16 %v70
  %v224 = vunpack.c.h.b16 %v70
  %v225 = vpack.c.b16 %v165, %v161
  %v226 = vpack.c.b16 %v166, %v162
  %v227 = vpack.c.b16 %v167, %v163
  %v228 = vpack.c.b16 %v168, %v164
  %v229 = vpack.c.b16 %v173, %v169
  %v230 = vpack.c.b16 %v174, %v170
  %v231 = vpack.c.b16 %v175, %v171
  %v232 = vpack.c.b16 %v176, %v172
  %v233 = vpack.c.b16 %v181, %v177
  %v234 = vpack.c.b16 %v182, %v178
  %v235 = vpack.c.b16 %v183, %v179
  %v236 = vpack.c.b16 %v184, %v180
  %v237 = vpack.c.b16 %v189, %v185
  %v238 = vpack.c.b16 %v190, %v186
  %v239 = vpack.c.b16 %v191, %v187
  %v240 = vpack.c.b16 %v192, %v188
  %v241 = vpack.c.b16 %v197, %v193
  %v242 = vpack.c.b16 %v198, %v194
  %v243 = vpack.c.b16 %v199, %v195
  %v244 = vpack.c.b16 %v200, %v196
  %v245 = vpack.c.b16 %v205, %v201
  %v246 = vpack.c.b16 %v206, %v202
  %v247 = vpack.c.b16 %v207, %v203
  %v248 = vpack.c.b16 %v208, %v204
  %v249 = vpack.c.b16 %v213, %v209
  %v250 = vpack.c.b16 %v214, %v210
  %v251 = vpack.c.b16 %v215, %v211
  %v252 = vpack.c.b16 %v216, %v212
  %v253 = vpack.c.b16 %v221, %v217
  %v254 = vpack.c.b16 %v222, %v218
  %v255 = vpack.c.b16 %v223, %v219
  %v256 = vpack.c.b16 %v224, %v220
  %289 = vmatpush.bf16.msra.mxu0 %v253
  %290 = vmatpush.bf16.msra.mxu0 %v249
  %291 = vmatpush.bf16.msra.mxu0 %v245
  %292 = vmatpush.bf16.msra.mxu0 %v241
  %293 = vmatpush.bf16.msra.mxu0 %v237
  %294 = vmatpush.bf16.msra.mxu0 %v233
  %295 = vmatpush.bf16.msra.mxu0 %v229
  %296 = vmatpush.bf16.msra.mxu0 %v225
  %297 = vmatmul.bf16.gmra.mxu0 %v113
  %v298 = vpop.f32.mrf.mxu0
  %v299 = vadd.f32 %v73, %v298
  %v300 = vpop.f32.mrf.mxu0
  %v301 = vadd.f32 %v73, %v300
  %302 = vmatmul.bf16.gmra.mxu0 %v114
  %v303 = vpop.f32.mrf.mxu0
  %v304 = vadd.f32 %v73, %v303
  %v305 = vpop.f32.mrf.mxu0
  %v306 = vadd.f32 %v73, %v305
  %307 = vmatmul.bf16.gmra.mxu0 %v115
  %v308 = vpop.f32.mrf.mxu0
  %v309 = vadd.f32 %v73, %v308
  %v310 = vpop.f32.mrf.mxu0
  %v311 = vadd.f32 %v73, %v310
  %312 = vmatmul.bf16.gmra.mxu0 %v116
  %v313 = vpop.f32.mrf.mxu0
  %v314 = vadd.f32 %v73, %v313
  %v315 = vpop.f32.mrf.mxu0
  %v316 = vadd.f32 %v73, %v315
  %317 = vmatmul.bf16.gmra.mxu0 %v117
  %v318 = vpop.f32.mrf.mxu0
  %v319 = vadd.f32 %v73, %v318
  %v320 = vpop.f32.mrf.mxu0
  %v321 = vadd.f32 %v73, %v320
  %322 = vmatmul.bf16.gmra.mxu0 %v118
  %v323 = vpop.f32.mrf.mxu0
  %v324 = vadd.f32 %v73, %v323
  %v325 = vpop.f32.mrf.mxu0
  %v326 = vadd.f32 %v73, %v325
  %327 = vmatmul.bf16.gmra.mxu0 %v119
  %v328 = vpop.f32.mrf.mxu0
  %v329 = vadd.f32 %v73, %v328
  %v330 = vpop.f32.mrf.mxu0
  %v331 = vadd.f32 %v73, %v330
  %332 = vmatmul.bf16.gmra.mxu0 %v120
  %v333 = vpop.f32.mrf.mxu0
  %v334 = vadd.f32 %v73, %v333
  %v335 = vpop.f32.mrf.mxu0
  %v336 = vadd.f32 %v73, %v335
  %337 = vdwg.mxu0
  %338 = vmatpush.bf16.msra.mxu0 %v254
  %339 = vmatpush.bf16.msra.mxu0 %v250
  %340 = vmatpush.bf16.msra.mxu0 %v246
  %341 = vmatpush.bf16.msra.mxu0 %v242
  %342 = vmatpush.bf16.msra.mxu0 %v238
  %343 = vmatpush.bf16.msra.mxu0 %v234
  %344 = vmatpush.bf16.msra.mxu0 %v230
  %345 = vmatpush.bf16.msra.mxu0 %v226
  %346 = vmatmul.bf16.gmra.mxu0 %v113
  %v347 = vpop.f32.mrf.mxu0
  %v348 = vadd.f32 %v74, %v347
  %v349 = vpop.f32.mrf.mxu0
  %v350 = vadd.f32 %v74, %v349
  %351 = vmatmul.bf16.gmra.mxu0 %v114
  %v352 = vpop.f32.mrf.mxu0
  %v353 = vadd.f32 %v74, %v352
  %v354 = vpop.f32.mrf.mxu0
  %v355 = vadd.f32 %v74, %v354
  %356 = vmatmul.bf16.gmra.mxu0 %v115
  %v357 = vpop.f32.mrf.mxu0
  %v358 = vadd.f32 %v74, %v357
  %v359 = vpop.f32.mrf.mxu0
  %v360 = vadd.f32 %v74, %v359
  %361 = vmatmul.bf16.gmra.mxu0 %v116
  %v362 = vpop.f32.mrf.mxu0
  %v363 = vadd.f32 %v74, %v362
  %v364 = vpop.f32.mrf.mxu0
  %v365 = vadd.f32 %v74, %v364
  %366 = vmatmul.bf16.gmra.mxu0 %v117
  %v367 = vpop.f32.mrf.mxu0
  %v368 = vadd.f32 %v74, %v367
  %v369 = vpop.f32.mrf.mxu0
  %v370 = vadd.f32 %v74, %v369
  %371 = vmatmul.bf16.gmra.mxu0 %v118
  %v372 = vpop.f32.mrf.mxu0
  %v373 = vadd.f32 %v74, %v372
  %v374 = vpop.f32.mrf.mxu0
  %v375 = vadd.f32 %v74, %v374
  %376 = vmatmul.bf16.gmra.mxu0 %v119
  %v377 = vpop.f32.mrf.mxu0
  %v378 = vadd.f32 %v74, %v377
  %v379 = vpop.f32.mrf.mxu0
  %v380 = vadd.f32 %v74, %v379
  %381 = vmatmul.bf16.gmra.mxu0 %v120
  %v382 = vpop.f32.mrf.mxu0
  %v383 = vadd.f32 %v74, %v382
  %v384 = vpop.f32.mrf.mxu0
  %v385 = vadd.f32 %v74, %v384
  %386 = vdwg.mxu0
  %387 = vmatpush.bf16.msra.mxu0 %v255
  %388 = vmatpush.bf16.msra.mxu0 %v251
  %389 = vmatpush.bf16.msra.mxu0 %v247
  %390 = vmatpush.bf16.msra.mxu0 %v243
  %391 = vmatpush.bf16.msra.mxu0 %v239
  %392 = vmatpush.bf16.msra.mxu0 %v235
  %393 = vmatpush.bf16.msra.mxu0 %v231
  %394 = vmatpush.bf16.msra.mxu0 %v227
  %395 = vmatmul.bf16.gmra.mxu0 %v113
  %v396 = vpop.f32.mrf.mxu0
  %v397 = vadd.f32 %v75, %v396
  %v398 = vpop.f32.mrf.mxu0
  %v399 = vadd.f32 %v75, %v398
  %400 = vmatmul.bf16.gmra.mxu0 %v114
  %v401 = vpop.f32.mrf.mxu0
  %v402 = vadd.f32 %v75, %v401
  %v403 = vpop.f32.mrf.mxu0
  %v404 = vadd.f32 %v75, %v403
  %405 = vmatmul.bf16.gmra.mxu0 %v115
  %v406 = vpop.f32.mrf.mxu0
  %v407 = vadd.f32 %v75, %v406
  %v408 = vpop.f32.mrf.mxu0
  %v409 = vadd.f32 %v75, %v408
  %410 = vmatmul.bf16.gmra.mxu0 %v116
  %v411 = vpop.f32.mrf.mxu0
  %v412 = vadd.f32 %v75, %v411
  %v413 = vpop.f32.mrf.mxu0
  %v414 = vadd.f32 %v75, %v413
  %415 = vmatmul.bf16.gmra.mxu0 %v117
  %v416 = vpop.f32.mrf.mxu0
  %v417 = vadd.f32 %v75, %v416
  %v418 = vpop.f32.mrf.mxu0
  %v419 = vadd.f32 %v75, %v418
  %420 = vmatmul.bf16.gmra.mxu0 %v118
  %v421 = vpop.f32.mrf.mxu0
  %v422 = vadd.f32 %v75, %v421
  %v423 = vpop.f32.mrf.mxu0
  %v424 = vadd.f32 %v75, %v423
  %425 = vmatmul.bf16.gmra.mxu0 %v119
  %v426 = vpop.f32.mrf.mxu0
  %v427 = vadd.f32 %v75, %v426
  %v428 = vpop.f32.mrf.mxu0
  %v429 = vadd.f32 %v75, %v428
  %430 = vmatmul.bf16.gmra.mxu0 %v120
  %v431 = vpop.f32.mrf.mxu0
  %v432 = vadd.f32 %v75, %v431
  %v433 = vpop.f32.mrf.mxu0
  %v434 = vadd.f32 %v75, %v433
  %435 = vdwg.mxu0
  %436 = vmatpush.bf16.msra.mxu0 %v256
  %437 = vmatpush.bf16.msra.mxu0 %v252
  %438 = vmatpush.bf16.msra.mxu0 %v248
  %439 = vmatpush.bf16.msra.mxu0 %v244
  %440 = vmatpush.bf16.msra.mxu0 %v240
  %441 = vmatpush.bf16.msra.mxu0 %v236
  %442 = vmatpush.bf16.msra.mxu0 %v232
  %443 = vmatpush.bf16.msra.mxu0 %v228
  %444 = vmatmul.bf16.gmra.mxu0 %v113
  %v445 = vpop.f32.mrf.mxu0
  %v446 = vadd.f32 %v76, %v445
  %v447 = vpop.f32.mrf.mxu0
  %v448 = vadd.f32 %v76, %v447
  %449 = vmatmul.bf16.gmra.mxu0 %v114
  %v450 = vpop.f32.mrf.mxu0
  %v451 = vadd.f32 %v76, %v450
  %v452 = vpop.f32.mrf.mxu0
  %v453 = vadd.f32 %v76, %v452
  %454 = vmatmul.bf16.gmra.mxu0 %v115
  %v455 = vpop.f32.mrf.mxu0
  %v456 = vadd.f32 %v76, %v455
  %v457 = vpop.f32.mrf.mxu0
  %v458 = vadd.f32 %v76, %v457
  %459 = vmatmul.bf16.gmra.mxu0 %v116
  %v460 = vpop.f32.mrf.mxu0
  %v461 = vadd.f32 %v76, %v460
  %v462 = vpop.f32.mrf.mxu0
  %v463 = vadd.f32 %v76, %v462
  %464 = vmatmul.bf16.gmra.mxu0 %v117
  %v465 = vpop.f32.mrf.mxu0
  %v466 = vadd.f32 %v76, %v465
  %v467 = vpop.f32.mrf.mxu0
  %v468 = vadd.f32 %v76, %v467
  %469 = vmatmul.bf16.gmra.mxu0 %v118
  %v470 = vpop.f32.mrf.mxu0
  %v471 = vadd.f32 %v76, %v470
  %v472 = vpop.f32.mrf.mxu0
  %v473 = vadd.f32 %v76, %v472
  %474 = vmatmul.bf16.gmra.mxu0 %v119
  %v475 = vpop.f32.mrf.mxu0
  %v476 = vadd.f32 %v76, %v475
  %v477 = vpop.f32.mrf.mxu0
  %v478 = vadd.f32 %v76, %v477
  %479 = vmatmul.bf16.gmra.mxu0 %v120
  %v480 = vpop.f32.mrf.mxu0
  %v481 = vadd.f32 %v76, %v480
  %v482 = vpop.f32.mrf.mxu0
  %v483 = vadd.f32 %v76, %v482
  %484 = vdwg.mxu0
  %485 = vst [vmem:[#allocation4] sm:$0xff] %v299
  %486 = vst [vmem:[#allocation4 + $0x8] sm:$0xff] %v348
  %487 = vst [vmem:[#allocation4 + $0x10] sm:$0xff] %v397
  %488 = vst [vmem:[#allocation4 + $0x18] sm:$0xff] %v446
  %489 = vst [vmem:[#allocation4 + $0x20] sm:$0xff] %v301
  %490 = vst [vmem:[#allocation4 + $0x28] sm:$0xff] %v350
  %491 = vst [vmem:[#allocation4 + $0x30] sm:$0xff] %v399
  %492 = vst [vmem:[#allocation4 + $0x38] sm:$0xff] %v448
  %493 = vst [vmem:[#allocation4 + $0x40] sm:$0xff] %v304
  %494 = vst [vmem:[#allocation4 + $0x48] sm:$0xff] %v353
  %495 = vst [vmem:[#allocation4 + $0x50] sm:$0xff] %v402
  %496 = vst [vmem:[#allocation4 + $0x58] sm:$0xff] %v451
  %497 = vst [vmem:[#allocation4 + $0x60] sm:$0xff] %v306
  %498 = vst [vmem:[#allocation4 + $0x68] sm:$0xff] %v355
  %499 = vst [vmem:[#allocation4 + $0x70] sm:$0xff] %v404
  %500 = vst [vmem:[#allocation4 + $0x78] sm:$0xff] %v453
  %501 = vst [vmem:[#allocation4 + $0x80] sm:$0xff] %v309
  %502 = vst [vmem:[#allocation4 + $0x88] sm:$0xff] %v358
  %503 = vst [vmem:[#allocation4 + $0x90] sm:$0xff] %v407
  %504 = vst [vmem:[#allocation4 + $0x98] sm:$0xff] %v456
  %505 = vst [vmem:[#allocation4 + $0xa0] sm:$0xff] %v311
  %506 = vst [vmem:[#allocation4 + $0xa8] sm:$0xff] %v360
  %507 = vst [vmem:[#allocation4 + $0xb0] sm:$0xff] %v409
  %508 = vst [vmem:[#allocation4 + $0xb8] sm:$0xff] %v458
  %509 = vst [vmem:[#allocation4 + $0xc0] sm:$0xff] %v314
  %510 = vst [vmem:[#allocation4 + $0xc8] sm:$0xff] %v363
  %511 = vst [vmem:[#allocation4 + $0xd0] sm:$0xff] %v412
  %512 = vst [vmem:[#allocation4 + $0xd8] sm:$0xff] %v461
  %513 = vst [vmem:[#allocation4 + $0xe0] sm:$0xff] %v316
  %514 = vst [vmem:[#allocation4 + $0xe8] sm:$0xff] %v365
  %515 = vst [vmem:[#allocation4 + $0xf0] sm:$0xff] %v414
  %516 = vst [vmem:[#allocation4 + $0xf8] sm:$0xff] %v463
  %517 = vst [vmem:[#allocation4 + $0x100] sm:$0xff] %v319
  %518 = vst [vmem:[#allocation4 + $0x108] sm:$0xff] %v368
  %519 = vst [vmem:[#allocation4 + $0x110] sm:$0xff] %v417
  %520 = vst [vmem:[#allocation4 + $0x118] sm:$0xff] %v466
  %521 = vst [vmem:[#allocation4 + $0x120] sm:$0xff] %v321
  %522 = vst [vmem:[#allocation4 + $0x128] sm:$0xff] %v370
  %523 = vst [vmem:[#allocation4 + $0x130] sm:$0xff] %v419
  %524 = vst [vmem:[#allocation4 + $0x138] sm:$0xff] %v468
  %525 = vst [vmem:[#allocation4 + $0x140] sm:$0xff] %v324
  %526 = vst [vmem:[#allocation4 + $0x148] sm:$0xff] %v373
  %527 = vst [vmem:[#allocation4 + $0x150] sm:$0xff] %v422
  %528 = vst [vmem:[#allocation4 + $0x158] sm:$0xff] %v471
  %529 = vst [vmem:[#allocation4 + $0x160] sm:$0xff] %v326
  %530 = vst [vmem:[#allocation4 + $0x168] sm:$0xff] %v375
  %531 = vst [vmem:[#allocation4 + $0x170] sm:$0xff] %v424
  %532 = vst [vmem:[#allocation4 + $0x178] sm:$0xff] %v473
  %533 = vst [vmem:[#allocation4 + $0x180] sm:$0xff] %v329
  %534 = vst [vmem:[#allocation4 + $0x188] sm:$0xff] %v378
  %535 = vst [vmem:[#allocation4 + $0x190] sm:$0xff] %v427
  %536 = vst [vmem:[#allocation4 + $0x198] sm:$0xff] %v476
  %537 = vst [vmem:[#allocation4 + $0x1a0] sm:$0xff] %v331
  %538 = vst [vmem:[#allocation4 + $0x1a8] sm:$0xff] %v380
  %539 = vst [vmem:[#allocation4 + $0x1b0] sm:$0xff] %v429
  %540 = vst [vmem:[#allocation4 + $0x1b8] sm:$0xff] %v478
  %541 = vst [vmem:[#allocation4 + $0x1c0] sm:$0xff] %v334
  %542 = vst [vmem:[#allocation4 + $0x1c8] sm:$0xff] %v383
  %543 = vst [vmem:[#allocation4 + $0x1d0] sm:$0xff] %v432
  %544 = vst [vmem:[#allocation4 + $0x1d8] sm:$0xff] %v481
  %545 = vst [vmem:[#allocation4 + $0x1e0] sm:$0xff] %v336
  %546 = vst [vmem:[#allocation4 + $0x1e8] sm:$0xff] %v385
  %547 = vst [vmem:[#allocation4 + $0x1f0] sm:$0xff] %v434
  %548 = vst [vmem:[#allocation4 + $0x1f8] sm:$0xff] %v483
  %v549 = vld [vmem:[%s2] sm:$0xff]
  %v550 = vld [vmem:[%s2 + $0x8] sm:$0xff]
  %v551 = vld [vmem:[%s2 + $0x10] sm:$0xff]
  %v552 = vld [vmem:[%s2 + $0x18] sm:$0xff]
  %v553 = vld [vmem:[%s2 + $0x20] sm:$0xff]
  %v554 = vld [vmem:[%s2 + $0x28] sm:$0xff]
  %v555 = vld [vmem:[%s2 + $0x30] sm:$0xff]
  %v556 = vld [vmem:[%s2 + $0x38] sm:$0xff]
  %v557 = vld [vmem:[%s2 + $0x40] sm:$0xff]
  %v558 = vld [vmem:[%s2 + $0x48] sm:$0xff]
  %v559 = vld [vmem:[%s2 + $0x50] sm:$0xff]
  %v560 = vld [vmem:[%s2 + $0x58] sm:$0xff]
  %v561 = vld [vmem:[%s2 + $0x60] sm:$0xff]
  %v562 = vld [vmem:[%s2 + $0x68] sm:$0xff]
  %v563 = vld [vmem:[%s2 + $0x70] sm:$0xff]
  %v564 = vld [vmem:[%s2 + $0x78] sm:$0xff]
  %v565 = vld [vmem:[%s2 + $0x80] sm:$0xff]
  %v566 = vld [vmem:[%s2 + $0x88] sm:$0xff]
  %v567 = vld [vmem:[%s2 + $0x90] sm:$0xff]
  %v568 = vld [vmem:[%s2 + $0x98] sm:$0xff]
  %v569 = vld [vmem:[%s2 + $0xa0] sm:$0xff]
  %v570 = vld [vmem:[%s2 + $0xa8] sm:$0xff]
  %v571 = vld [vmem:[%s2 + $0xb0] sm:$0xff]
  %v572 = vld [vmem:[%s2 + $0xb8] sm:$0xff]
  %v573 = vld [vmem:[%s2 + $0xc0] sm:$0xff]
  %v574 = vld [vmem:[%s2 + $0xc8] sm:$0xff]
  %v575 = vld [vmem:[%s2 + $0xd0] sm:$0xff]
  %v576 = vld [vmem:[%s2 + $0xd8] sm:$0xff]
  %v577 = vld [vmem:[%s2 + $0xe0] sm:$0xff]
  %v578 = vld [vmem:[%s2 + $0xe8] sm:$0xff]
  %v579 = vld [vmem:[%s2 + $0xf0] sm:$0xff]
  %v580 = vld [vmem:[%s2 + $0xf8] sm:$0xff]
  %v581 = vld [vmem:[#allocation2] sm:$0xff]
  %v582 = vld [vmem:[#allocation3] sm:$0xff]
  %v583 = vld [vmem:[#allocation4] sm:$0xff]
  %v584 = vld [vmem:[#allocation4 + $0x8] sm:$0xff]
  %v585 = vld [vmem:[#allocation4 + $0x10] sm:$0xff]
  %v586 = vld [vmem:[#allocation4 + $0x18] sm:$0xff]
  %v587 = vpack.c.bf16 %v581, %v581
  %v620 = vunpack.c.l.b16 %v549
  %v621 = vunpack.c.h.b16 %v549
  %v622 = vunpack.c.l.b16 %v550
  %v623 = vunpack.c.h.b16 %v550
  %v624 = vunpack.c.l.b16 %v551
  %v625 = vunpack.c.h.b16 %v551
  %v626 = vunpack.c.l.b16 %v552
  %v627 = vunpack.c.h.b16 %v552
  %v628 = vunpack.c.l.b16 %v553
  %v629 = vunpack.c.h.b16 %v553
  %v630 = vunpack.c.l.b16 %v554
  %v631 = vunpack.c.h.b16 %v554
  %v632 = vunpack.c.l.b16 %v555
  %v633 = vunpack.c.h.b16 %v555
  %v634 = vunpack.c.l.b16 %v556
  %v635 = vunpack.c.h.b16 %v556
  %v636 = vunpack.c.l.b16 %v557
  %v637 = vunpack.c.h.b16 %v557
  %v638 = vunpack.c.l.b16 %v558
  %v639 = vunpack.c.h.b16 %v558
  %v640 = vunpack.c.l.b16 %v559
  %v641 = vunpack.c.h.b16 %v559
  %v642 = vunpack.c.l.b16 %v560
  %v643 = vunpack.c.h.b16 %v560
  %v644 = vunpack.c.l.b16 %v561
  %v645 = vunpack.c.h.b16 %v561
  %v646 = vunpack.c.l.b16 %v562
  %v647 = vunpack.c.h.b16 %v562
  %v648 = vunpack.c.l.b16 %v563
  %v649 = vunpack.c.h.b16 %v563
  %v650 = vunpack.c.l.b16 %v564
  %v651 = vunpack.c.h.b16 %v564
  %v652 = vunpack.c.l.b16 %v565
  %v653 = vunpack.c.h.b16 %v565
  %v654 = vunpack.c.l.b16 %v566
  %v655 = vunpack.c.h.b16 %v566
  %v656 = vunpack.c.l.b16 %v567
  %v657 = vunpack.c.h.b16 %v567
  %v658 = vunpack.c.l.b16 %v568
  %v659 = vunpack.c.h.b16 %v568
  %v660 = vunpack.c.l.b16 %v569
  %v661 = vunpack.c.h.b16 %v569
  %v662 = vunpack.c.l.b16 %v570
  %v663 = vunpack.c.h.b16 %v570
  %v664 = vunpack.c.l.b16 %v571
  %v665 = vunpack.c.h.b16 %v571
  %v666 = vunpack.c.l.b16 %v572
  %v667 = vunpack.c.h.b16 %v572
  %v668 = vunpack.c.l.b16 %v573
  %v669 = vunpack.c.h.b16 %v573
  %v670 = vunpack.c.l.b16 %v574
  %v671 = vunpack.c.h.b16 %v574
  %v672 = vunpack.c.l.b16 %v575
  %v673 = vunpack.c.h.b16 %v575
  %v674 = vunpack.c.l.b16 %v576
  %v675 = vunpack.c.h.b16 %v576
  %v676 = vunpack.c.l.b16 %v577
  %v677 = vunpack.c.h.b16 %v577
  %v678 = vunpack.c.l.b16 %v578
  %v679 = vunpack.c.h.b16 %v578
  %v680 = vunpack.c.l.b16 %v579
  %v681 = vunpack.c.h.b16 %v579
  %v682 = vunpack.c.l.b16 %v580
  %v683 = vunpack.c.h.b16 %v580
  %v684 = vpack.c.b16 %v624, %v620
  %v685 = vpack.c.b16 %v625, %v621
  %v686 = vpack.c.b16 %v626, %v622
  %v687 = vpack.c.b16 %v627, %v623
  %v688 = vpack.c.b16 %v632, %v628
  %v689 = vpack.c.b16 %v633, %v629
  %v690 = vpack.c.b16 %v634, %v630
  %v691 = vpack.c.b16 %v635, %v631
  %v692 = vpack.c.b16 %v640, %v636
  %v693 = vpack.c.b16 %v641, %v637
  %v694 = vpack.c.b16 %v642, %v638
  %v695 = vpack.c.b16 %v643, %v639
  %v696 = vpack.c.b16 %v648, %v644
  %v697 = vpack.c.b16 %v649, %v645
  %v698 = vpack.c.b16 %v650, %v646
  %v699 = vpack.c.b16 %v651, %v647
  %v700 = vpack.c.b16 %v656, %v652
  %v701 = vpack.c.b16 %v657, %v653
  %v702 = vpack.c.b16 %v658, %v654
  %v703 = vpack.c.b16 %v659, %v655
  %v704 = vpack.c.b16 %v664, %v660
  %v705 = vpack.c.b16 %v665, %v661
  %v706 = vpack.c.b16 %v666, %v662
  %v707 = vpack.c.b16 %v667, %v663
  %v708 = vpack.c.b16 %v672, %v668
  %v709 = vpack.c.b16 %v673, %v669
  %v710 = vpack.c.b16 %v674, %v670
  %v711 = vpack.c.b16 %v675, %v671
  %v712 = vpack.c.b16 %v680, %v676
  %v713 = vpack.c.b16 %v681, %v677
  %v714 = vpack.c.b16 %v682, %v678
  %v715 = vpack.c.b16 %v683, %v679
  %748 = vmatpush.bf16.msra.mxu0 %v712
  %749 = vmatpush.bf16.msra.mxu0 %v708
  %750 = vmatpush.bf16.msra.mxu0 %v704
  %751 = vmatpush.bf16.msra.mxu0 %v700
  %752 = vmatpush.bf16.msra.mxu0 %v696
  %753 = vmatpush.bf16.msra.mxu0 %v692
  %754 = vmatpush.bf16.msra.mxu0 %v688
  %755 = vmatpush.bf16.msra.mxu0 %v684
  %756 = vmatmul.bf16.gmra.mxu0 %v587
  %v757 = vpop.f32.mrf.mxu0
  %v758 = vadd.f32 0.0, %v757
  %v759 = vpop.f32.mrf.mxu0
  %760 = vdwg.mxu0
  %761 = vmatpush.bf16.msra.mxu0 %v713
  %762 = vmatpush.bf16.msra.mxu0 %v709
  %763 = vmatpush.bf16.msra.mxu0 %v705
  %764 = vmatpush.bf16.msra.mxu0 %v701
  %765 = vmatpush.bf16.msra.mxu0 %v697
  %766 = vmatpush.bf16.msra.mxu0 %v693
  %767 = vmatpush.bf16.msra.mxu0 %v689
  %768 = vmatpush.bf16.msra.mxu0 %v685
  %769 = vmatmul.bf16.gmra.mxu0 %v587
  %v770 = vpop.f32.mrf.mxu0
  %v771 = vadd.f32 0.0, %v770
  %v772 = vpop.f32.mrf.mxu0
  %773 = vdwg.mxu0
  %774 = vmatpush.bf16.msra.mxu0 %v714
  %775 = vmatpush.bf16.msra.mxu0 %v710
  %776 = vmatpush.bf16.msra.mxu0 %v706
  %777 = vmatpush.bf16.msra.mxu0 %v702
  %778 = vmatpush.bf16.msra.mxu0 %v698
  %779 = vmatpush.bf16.msra.mxu0 %v694
  %780 = vmatpush.bf16.msra.mxu0 %v690
  %781 = vmatpush.bf16.msra.mxu0 %v686
  %782 = vmatmul.bf16.gmra.mxu0 %v587
  %v783 = vpop.f32.mrf.mxu0
  %v784 = vadd.f32 0.0, %v783
  %v785 = vpop.f32.mrf.mxu0
  %786 = vdwg.mxu0
  %787 = vmatpush.bf16.msra.mxu0 %v715
  %788 = vmatpush.bf16.msra.mxu0 %v711
  %789 = vmatpush.bf16.msra.mxu0 %v707
  %790 = vmatpush.bf16.msra.mxu0 %v703
  %791 = vmatpush.bf16.msra.mxu0 %v699
  %792 = vmatpush.bf16.msra.mxu0 %v695
  %793 = vmatpush.bf16.msra.mxu0 %v691
  %794 = vmatpush.bf16.msra.mxu0 %v687
  %795 = vmatmul.bf16.gmra.mxu0 %v587
  %v796 = vpop.f32.mrf.mxu0
  %v797 = vadd.f32 0.0, %v796
  %v798 = vpop.f32.mrf.mxu0
  %799 = vdwg.mxu0
  %v800 = vadd.f32 %v583, %v758
  %v801 = vadd.f32 %v584, %v771
  %v802 = vadd.f32 %v585, %v784
  %v803 = vadd.f32 %v586, %v797
  %v804 = vtanh.pop %v800
  %v805 = vtanh.pop %v801
  %v806 = vtanh.pop %v802
  %v807 = vtanh.pop %v803
  %v808 = vmul.f32 %v804, 0.5
  %v809 = vadd.f32 %v808, 0.5
  %v810 = vmul.f32 %v805, 0.5
  %v811 = vadd.f32 %v810, 0.5
  %v812 = vmul.f32 %v807, 0.5
  %v813 = vadd.f32 %v812, 0.5
  %v814 = vmul.f32 %v811, %v582
  %v815 = vmul.f32 %v809, %v806
  %v816 = vadd.f32 %v814, %v815
  %v817 = vtanh.pop %v816
  %v818 = vmul.f32 %v813, %v817
  %819 = vst [vmem:[%s4] sm:$0xff] %v818
  %s820 = scalar_lea.vmem [#allocation4], 32
  %v821 = vld [vmem:[%s820] sm:$0xff]
  %v822 = vld [vmem:[%s820 + $0x8] sm:$0xff]
  %v823 = vld [vmem:[%s820 + $0x10] sm:$0xff]
  %v824 = vld [vmem:[%s820 + $0x18] sm:$0xff]
  %v825 = vpack.c.bf16 %v818, %v818
  %826 = vmatpush.bf16.msra.mxu0 %v712
  %827 = vmatpush.bf16.msra.mxu0 %v708
  %828 = vmatpush.bf16.msra.mxu0 %v704
  %829 = vmatpush.bf16.msra.mxu0 %v700
  %830 = vmatpush.bf16.msra.mxu0 %v696
  %831 = vmatpush.bf16.msra.mxu0 %v692
  %832 = vmatpush.bf16.msra.mxu0 %v688
  %833 = vmatpush.bf16.msra.mxu0 %v684
  %834 = vmatmul.bf16.gmra.mxu0 %v825
  %v835 = vpop.f32.mrf.mxu0
  %v836 = vadd.f32 0.0, %v835
  %v837 = vpop.f32.mrf.mxu0
  %838 = vdwg.mxu0
  %839 = vmatpush.bf16.msra.mxu0 %v713
  %840 = vmatpush.bf16.msra.mxu0 %v709
  %841 = vmatpush.bf16.msra.mxu0 %v705
  %842 = vmatpush.bf16.msra.mxu0 %v701
  %843 = vmatpush.bf16.msra.mxu0 %v697
  %844 = vmatpush.bf16.msra.mxu0 %v693
  %845 = vmatpush.bf16.msra.mxu0 %v689
  %846 = vmatpush.bf16.msra.mxu0 %v685
  %847 = vmatmul.bf16.gmra.mxu0 %v825
  %v848 = vpop.f32.mrf.mxu0
  %v849 = vadd.f32 0.0, %v848
  %v850 = vpop.f32.mrf.mxu0
  %851 = vdwg.mxu0
  %852 = vmatpush.bf16.msra.mxu0 %v714
  %853 = vmatpush.bf16.msra.mxu0 %v710
  %854 = vmatpush.bf16.msra.mxu0 %v706
  %855 = vmatpush.bf16.msra.mxu0 %v702
  %856 = vmatpush.bf16.msra.mxu0 %v698
  %857 = vmatpush.bf16.msra.mxu0 %v694
  %858 = vmatpush.bf16.msra.mxu0 %v690
  %859 = vmatpush.bf16.msra.mxu0 %v686
  %860 = vmatmul.bf16.gmra.mxu0 %v825
  %v861 = vpop.f32.mrf.mxu0
  %v862 = vadd.f32 0.0, %v861
  %v863 = vpop.f32.mrf.mxu0
  %864 = vdwg.mxu0
  %865 = vmatpush.bf16.msra.mxu0 %v715
  %866 = vmatpush.bf16.msra.mxu0 %v711
  %867 = vmatpush.bf16.msra.mxu0 %v707
  %868 = vmatpush.bf16.msra.mxu0 %v703
  %869 = vmatpush.bf16.msra.mxu0 %v699
  %870 = vmatpush.bf16.msra.mxu0 %v695
  %871 = vmatpush.bf16.msra.mxu0 %v691
  %872 = vmatpush.bf16.msra.mxu0 %v687
  %873 = vmatmul.bf16.gmra.mxu0 %v825
  %v874 = vpop.f32.mrf.mxu0
  %v875 = vadd.f32 0.0, %v874
  %v876 = vpop.f32.mrf.mxu0
  %877 = vdwg.mxu0
  %v878 = vadd.f32 %v821, %v836
  %v879 = vadd.f32 %v822, %v849
  %v880 = vadd.f32 %v823, %v862
  %v881 = vadd.f32 %v824, %v875
  %v882 = vtanh.pop %v878
  %v883 = vtanh.pop %v879
  %v884 = vtanh.pop %v880
  %v885 = vtanh.pop %v881
  %v886 = vmul.f32 %v882, 0.5
  %v887 = vadd.f32 %v886, 0.5
  %v888 = vmul.f32 %v883, 0.5
  %v889 = vadd.f32 %v888, 0.5
  %v890 = vmul.f32 %v885, 0.5
  %v891 = vadd.f32 %v890, 0.5
  %v892 = vmul.f32 %v889, %v816
  %v893 = vmul.f32 %v887, %v884
  %v894 = vadd.f32 %v892, %v893
  %v895 = vtanh.pop %v894
  %v896 = vmul.f32 %v891, %v895
  %s897 = scalar_lea.vmem %s4, 8
  %898 = vst [vmem:[%s897] sm:$0xff] %v896
  %s899 = scalar_lea.vmem [#allocation4], 64
  %v900 = vld [vmem:[%s899] sm:$0xff]
  %v901 = vld [vmem:[%s899 + $0x8] sm:$0xff]
  %v902 = vld [vmem:[%s899 + $0x10] sm:$0xff]
  %v903 = vld [vmem:[%s899 + $0x18] sm:$0xff]
  %v904 = vpack.c.bf16 %v896, %v896
  %905 = vmatpush.bf16.msra.mxu0 %v712
  %906 = vmatpush.bf16.msra.mxu0 %v708
  %907 = vmatpush.bf16.msra.mxu0 %v704
  %908 = vmatpush.bf16.msra.mxu0 %v700
  %909 = vmatpush.bf16.msra.mxu0 %v696
  %910 = vmatpush.bf16.msra.mxu0 %v692
  %911 = vmatpush.bf16.msra.mxu0 %v688
  %912 = vmatpush.bf16.msra.mxu0 %v684
  %913 = vmatmul.bf16.gmra.mxu0 %v904
  %v914 = vpop.f32.mrf.mxu0
  %v915 = vadd.f32 0.0, %v914
  %v916 = vpop.f32.mrf.mxu0
  %917 = vdwg.mxu0
  %918 = vmatpush.bf16.msra.mxu0 %v713
  %919 = vmatpush.bf16.msra.mxu0 %v709
  %920 = vmatpush.bf16.msra.mxu0 %v705
  %921 = vmatpush.bf16.msra.mxu0 %v701
  %922 = vmatpush.bf16.msra.mxu0 %v697
  %923 = vmatpush.bf16.msra.mxu0 %v693
  %924 = vmatpush.bf16.msra.mxu0 %v689
  %925 = vmatpush.bf16.msra.mxu0 %v685
  %926 = vmatmul.bf16.gmra.mxu0 %v904
  %v927 = vpop.f32.mrf.mxu0
  %v928 = vadd.f32 0.0, %v927
  %v929 = vpop.f32.mrf.mxu0
  %930 = vdwg.mxu0
  %931 = vmatpush.bf16.msra.mxu0 %v714
  %932 = vmatpush.bf16.msra.mxu0 %v710
  %933 = vmatpush.bf16.msra.mxu0 %v706
  %934 = vmatpush.bf16.msra.mxu0 %v702
  %935 = vmatpush.bf16.msra.mxu0 %v698
  %936 = vmatpush.bf16.msra.mxu0 %v694
  %937 = vmatpush.bf16.msra.mxu0 %v690
  %938 = vmatpush.bf16.msra.mxu0 %v686
  %939 = vmatmul.bf16.gmra.mxu0 %v904
  %v940 = vpop.f32.mrf.mxu0
  %v941 = vadd.f32 0.0, %v940
  %v942 = vpop.f32.mrf.mxu0
  %943 = vdwg.mxu0
  %944 = vmatpush.bf16.msra.mxu0 %v715
  %945 = vmatpush.bf16.msra.mxu0 %v711
  %946 = vmatpush.bf16.msra.mxu0 %v707
  %947 = vmatpush.bf16.msra.mxu0 %v703
  %948 = vmatpush.bf16.msra.mxu0 %v699
  %949 = vmatpush.bf16.msra.mxu0 %v695
  %950 = vmatpush.bf16.msra.mxu0 %v691
  %951 = vmatpush.bf16.msra.mxu0 %v687
  %952 = vmatmul.bf16.gmra.mxu0 %v904
  %v953 = vpop.f32.mrf.mxu0
  %v954 = vadd.f32 0.0, %v953
  %v955 = vpop.f32.mrf.mxu0
  %956 = vdwg.mxu0
  %v957 = vadd.f32 %v900, %v915
  %v958 = vadd.f32 %v901, %v928
  %v959 = vadd.f32 %v902, %v941
  %v960 = vadd.f32 %v903, %v954
  %v961 = vtanh.pop %v957
  %v962 = vtanh.pop %v958
  %v963 = vtanh.pop %v959
  %v964 = vtanh.pop %v960
  %v965 = vmul.f32 %v961, 0.5
  %v966 = vadd.f32 %v965, 0.5
  %v967 = vmul.f32 %v962, 0.5
  %v968 = vadd.f32 %v967, 0.5
  %v969 = vmul.f32 %v964, 0.5
  %v970 = vadd.f32 %v969, 0.5
  %v971 = vmul.f32 %v968, %v894
  %v972 = vmul.f32 %v966, %v963
  %v973 = vadd.f32 %v971, %v972
  %v974 = vtanh.pop %v973
  %v975 = vmul.f32 %v970, %v974
  %s976 = scalar_lea.vmem %s4, 16
  %977 = vst [vmem:[%s976] sm:$0xff] %v975
  %s978 = scalar_lea.vmem [#allocation4], 96
  %v979 = vld [vmem:[%s978] sm:$0xff]
  %v980 = vld [vmem:[%s978 + $0x8] sm:$0xff]
  %v981 = vld [vmem:[%s978 + $0x10] sm:$0xff]
  %v982 = vld [vmem:[%s978 + $0x18] sm:$0xff]
  %v983 = vpack.c.bf16 %v975, %v975
  %984 = vmatpush.bf16.msra.mxu0 %v712
  %985 = vmatpush.bf16.msra.mxu0 %v708
  %986 = vmatpush.bf16.msra.mxu0 %v704
  %987 = vmatpush.bf16.msra.mxu0 %v700
  %988 = vmatpush.bf16.msra.mxu0 %v696
  %989 = vmatpush.bf16.msra.mxu0 %v692
  %990 = vmatpush.bf16.msra.mxu0 %v688
  %991 = vmatpush.bf16.msra.mxu0 %v684
  %992 = vmatmul.bf16.gmra.mxu0 %v983
  %v993 = vpop.f32.mrf.mxu0
  %v994 = vadd.f32 0.0, %v993
  %v995 = vpop.f32.mrf.mxu0
  %996 = vdwg.mxu0
  %997 = vmatpush.bf16.msra.mxu0 %v713
  %998 = vmatpush.bf16.msra.mxu0 %v709
  %999 = vmatpush.bf16.msra.mxu0 %v705
  %1000 = vmatpush.bf16.msra.mxu0 %v701
  %1001 = vmatpush.bf16.msra.mxu0 %v697
  %1002 = vmatpush.bf16.msra.mxu0 %v693
  %1003 = vmatpush.bf16.msra.mxu0 %v689
  %1004 = vmatpush.bf16.msra.mxu0 %v685
  %1005 = vmatmul.bf16.gmra.mxu0 %v983
  %v1006 = vpop.f32.mrf.mxu0
  %v1007 = vadd.f32 0.0, %v1006
  %v1008 = vpop.f32.mrf.mxu0
  %1009 = vdwg.mxu0
  %1010 = vmatpush.bf16.msra.mxu0 %v714
  %1011 = vmatpush.bf16.msra.mxu0 %v710
  %1012 = vmatpush.bf16.msra.mxu0 %v706
  %1013 = vmatpush.bf16.msra.mxu0 %v702
  %1014 = vmatpush.bf16.msra.mxu0 %v698
  %1015 = vmatpush.bf16.msra.mxu0 %v694
  %1016 = vmatpush.bf16.msra.mxu0 %v690
  %1017 = vmatpush.bf16.msra.mxu0 %v686
  %1018 = vmatmul.bf16.gmra.mxu0 %v983
  %v1019 = vpop.f32.mrf.mxu0
  %v1020 = vadd.f32 0.0, %v1019
  %v1021 = vpop.f32.mrf.mxu0
  %1022 = vdwg.mxu0
  %1023 = vmatpush.bf16.msra.mxu0 %v715
  %1024 = vmatpush.bf16.msra.mxu0 %v711
  %1025 = vmatpush.bf16.msra.mxu0 %v707
  %1026 = vmatpush.bf16.msra.mxu0 %v703
  %1027 = vmatpush.bf16.msra.mxu0 %v699
  %1028 = vmatpush.bf16.msra.mxu0 %v695
  %1029 = vmatpush.bf16.msra.mxu0 %v691
  %1030 = vmatpush.bf16.msra.mxu0 %v687
  %1031 = vmatmul.bf16.gmra.mxu0 %v983
  %v1032 = vpop.f32.mrf.mxu0
  %v1033 = vadd.f32 0.0, %v1032
  %v1034 = vpop.f32.mrf.mxu0
  %1035 = vdwg.mxu0
  %v1036 = vadd.f32 %v979, %v994
  %v1037 = vadd.f32 %v980, %v1007
  %v1038 = vadd.f32 %v981, %v1020
  %v1039 = vadd.f32 %v982, %v1033
  %v1040 = vtanh.pop %v1036
  %v1041 = vtanh.pop %v1037
  %v1042 = vtanh.pop %v1038
  %v1043 = vtanh.pop %v1039
  %v1044 = vmul.f32 %v1040, 0.5
  %v1045 = vadd.f32 %v1044, 0.5
  %v1046 = vmul.f32 %v1041, 0.5
  %v1047 = vadd.f32 %v1046, 0.5
  %v1048 = vmul.f32 %v1043, 0.5
  %v1049 = vadd.f32 %v1048, 0.5
  %v1050 = vmul.f32 %v1047, %v973
  %v1051 = vmul.f32 %v1045, %v1042
  %v1052 = vadd.f32 %v1050, %v1051
  %v1053 = vtanh.pop %v1052
  %v1054 = vmul.f32 %v1049, %v1053
  %s1055 = scalar_lea.vmem %s4, 24
  %1056 = vst [vmem:[%s1055] sm:$0xff] %v1054
  %s1057 = scalar_lea.vmem [#allocation4], 128
  %v1058 = vld [vmem:[%s1057] sm:$0xff]
  %v1059 = vld [vmem:[%s1057 + $0x8] sm:$0xff]
  %v1060 = vld [vmem:[%s1057 + $0x10] sm:$0xff]
  %v1061 = vld [vmem:[%s1057 + $0x18] sm:$0xff]
  %v1062 = vpack.c.bf16 %v1054, %v1054
  %1063 = vmatpush.bf16.msra.mxu0 %v712
  %1064 = vmatpush.bf16.msra.mxu0 %v708
  %1065 = vmatpush.bf16.msra.mxu0 %v704
  %1066 = vmatpush.bf16.msra.mxu0 %v700
  %1067 = vmatpush.bf16.msra.mxu0 %v696
  %1068 = vmatpush.bf16.msra.mxu0 %v692
  %1069 = vmatpush.bf16.msra.mxu0 %v688
  %1070 = vmatpush.bf16.msra.mxu0 %v684
  %1071 = vmatmul.bf16.gmra.mxu0 %v1062
  %v1072 = vpop.f32.mrf.mxu0
  %v1073 = vadd.f32 0.0, %v1072
  %v1074 = vpop.f32.mrf.mxu0
  %1075 = vdwg.mxu0
  %1076 = vmatpush.bf16.msra.mxu0 %v713
  %1077 = vmatpush.bf16.msra.mxu0 %v709
  %1078 = vmatpush.bf16.msra.mxu0 %v705
  %1079 = vmatpush.bf16.msra.mxu0 %v701
  %1080 = vmatpush.bf16.msra.mxu0 %v697
  %1081 = vmatpush.bf16.msra.mxu0 %v693
  %1082 = vmatpush.bf16.msra.mxu0 %v689
  %1083 = vmatpush.bf16.msra.mxu0 %v685
  %1084 = vmatmul.bf16.gmra.mxu0 %v1062
  %v1085 = vpop.f32.mrf.mxu0
  %v1086 = vadd.f32 0.0, %v1085
  %v1087 = vpop.f32.mrf.mxu0
  %1088 = vdwg.mxu0
  %1089 = vmatpush.bf16.msra.mxu0 %v714
  %1090 = vmatpush.bf16.msra.mxu0 %v710
  %1091 = vmatpush.bf16.msra.mxu0 %v706
  %1092 = vmatpush.bf16.msra.mxu0 %v702
  %1093 = vmatpush.bf16.msra.mxu0 %v698
  %1094 = vmatpush.bf16.msra.mxu0 %v694
  %1095 = vmatpush.bf16.msra.mxu0 %v690
  %1096 = vmatpush.bf16.msra.mxu0 %v686
  %1097 = vmatmul.bf16.gmra.mxu0 %v1062
  %v1098 = vpop.f32.mrf.mxu0
  %v1099 = vadd.f32 0.0, %v1098
  %v1100 = vpop.f32.mrf.mxu0
  %1101 = vdwg.mxu0
  %1102 = vmatpush.bf16.msra.mxu0 %v715
  %1103 = vmatpush.bf16.msra.mxu0 %v711
  %1104 = vmatpush.bf16.msra.mxu0 %v707
  %1105 = vmatpush.bf16.msra.mxu0 %v703
  %1106 = vmatpush.bf16.msra.mxu0 %v699
  %1107 = vmatpush.bf16.msra.mxu0 %v695
  %1108 = vmatpush.bf16.msra.mxu0 %v691
  %1109 = vmatpush.bf16.msra.mxu0 %v687
  %1110 = vmatmul.bf16.gmra.mxu0 %v1062
  %v1111 = vpop.f32.mrf.mxu0
  %v1112 = vadd.f32 0.0, %v1111
  %v1113 = vpop.f32.mrf.mxu0
  %1114 = vdwg.mxu0
  %v1115 = vadd.f32 %v1058, %v1073
  %v1116 = vadd.f32 %v1059, %v1086
  %v1117 = vadd.f32 %v1060, %v1099
  %v1118 = vadd.f32 %v1061, %v1112
  %v1119 = vtanh.pop %v1115
  %v1120 = vtanh.pop %v1116
  %v1121 = vtanh.pop %v1117
  %v1122 = vtanh.pop %v1118
  %v1123 = vmul.f32 %v1119, 0.5
  %v1124 = vadd.f32 %v1123, 0.5
  %v1125 = vmul.f32 %v1120, 0.5
  %v1126 = vadd.f32 %v1125, 0.5
  %v1127 = vmul.f32 %v1122, 0.5
  %v1128 = vadd.f32 %v1127, 0.5
  %v1129 = vmul.f32 %v1126, %v1052
  %v1130 = vmul.f32 %v1124, %v1121
  %v1131 = vadd.f32 %v1129, %v1130
  %v1132 = vtanh.pop %v1131
  %v1133 = vmul.f32 %v1128, %v1132
  %s1134 = scalar_lea.vmem %s4, 32
  %1135 = vst [vmem:[%s1134] sm:$0xff] %v1133
  %s1136 = scalar_lea.vmem [#allocation4], 160
  %v1137 = vld [vmem:[%s1136] sm:$0xff]
  %v1138 = vld [vmem:[%s1136 + $0x8] sm:$0xff]
  %v1139 = vld [vmem:[%s1136 + $0x10] sm:$0xff]
  %v1140 = vld [vmem:[%s1136 + $0x18] sm:$0xff]
  %v1141 = vpack.c.bf16 %v1133, %v1133
  %1142 = vmatpush.bf16.msra.mxu0 %v712
  %1143 = vmatpush.bf16.msra.mxu0 %v708
  %1144 = vmatpush.bf16.msra.mxu0 %v704
  %1145 = vmatpush.bf16.msra.mxu0 %v700
  %1146 = vmatpush.bf16.msra.mxu0 %v696
  %1147 = vmatpush.bf16.msra.mxu0 %v692
  %1148 = vmatpush.bf16.msra.mxu0 %v688
  %1149 = vmatpush.bf16.msra.mxu0 %v684
  %1150 = vmatmul.bf16.gmra.mxu0 %v1141
  %v1151 = vpop.f32.mrf.mxu0
  %v1152 = vadd.f32 0.0, %v1151
  %v1153 = vpop.f32.mrf.mxu0
  %1154 = vdwg.mxu0
  %1155 = vmatpush.bf16.msra.mxu0 %v713
  %1156 = vmatpush.bf16.msra.mxu0 %v709
  %1157 = vmatpush.bf16.msra.mxu0 %v705
  %1158 = vmatpush.bf16.msra.mxu0 %v701
  %1159 = vmatpush.bf16.msra.mxu0 %v697
  %1160 = vmatpush.bf16.msra.mxu0 %v693
  %1161 = vmatpush.bf16.msra.mxu0 %v689
  %1162 = vmatpush.bf16.msra.mxu0 %v685
  %1163 = vmatmul.bf16.gmra.mxu0 %v1141
  %v1164 = vpop.f32.mrf.mxu0
  %v1165 = vadd.f32 0.0, %v1164
  %v1166 = vpop.f32.mrf.mxu0
  %1167 = vdwg.mxu0
  %1168 = vmatpush.bf16.msra.mxu0 %v714
  %1169 = vmatpush.bf16.msra.mxu0 %v710
  %1170 = vmatpush.bf16.msra.mxu0 %v706
  %1171 = vmatpush.bf16.msra.mxu0 %v702
  %1172 = vmatpush.bf16.msra.mxu0 %v698
  %1173 = vmatpush.bf16.msra.mxu0 %v694
  %1174 = vmatpush.bf16.msra.mxu0 %v690
  %1175 = vmatpush.bf16.msra.mxu0 %v686
  %1176 = vmatmul.bf16.gmra.mxu0 %v1141
  %v1177 = vpop.f32.mrf.mxu0
  %v1178 = vadd.f32 0.0, %v1177
  %v1179 = vpop.f32.mrf.mxu0
  %1180 = vdwg.mxu0
  %1181 = vmatpush.bf16.msra.mxu0 %v715
  %1182 = vmatpush.bf16.msra.mxu0 %v711
  %1183 = vmatpush.bf16.msra.mxu0 %v707
  %1184 = vmatpush.bf16.msra.mxu0 %v703
  %1185 = vmatpush.bf16.msra.mxu0 %v699
  %1186 = vmatpush.bf16.msra.mxu0 %v695
  %1187 = vmatpush.bf16.msra.mxu0 %v691
  %1188 = vmatpush.bf16.msra.mxu0 %v687
  %1189 = vmatmul.bf16.gmra.mxu0 %v1141
  %v1190 = vpop.f32.mrf.mxu0
  %v1191 = vadd.f32 0.0, %v1190
  %v1192 = vpop.f32.mrf.mxu0
  %1193 = vdwg.mxu0
  %v1194 = vadd.f32 %v1137, %v1152
  %v1195 = vadd.f32 %v1138, %v1165
  %v1196 = vadd.f32 %v1139, %v1178
  %v1197 = vadd.f32 %v1140, %v1191
  %v1198 = vtanh.pop %v1194
  %v1199 = vtanh.pop %v1195
  %v1200 = vtanh.pop %v1196
  %v1201 = vtanh.pop %v1197
  %v1202 = vmul.f32 %v1198, 0.5
  %v1203 = vadd.f32 %v1202, 0.5
  %v1204 = vmul.f32 %v1199, 0.5
  %v1205 = vadd.f32 %v1204, 0.5
  %v1206 = vmul.f32 %v1201, 0.5
  %v1207 = vadd.f32 %v1206, 0.5
  %v1208 = vmul.f32 %v1205, %v1131
  %v1209 = vmul.f32 %v1203, %v1200
  %v1210 = vadd.f32 %v1208, %v1209
  %v1211 = vtanh.pop %v1210
  %v1212 = vmul.f32 %v1207, %v1211
  %s1213 = scalar_lea.vmem %s4, 40
  %1214 = vst [vmem:[%s1213] sm:$0xff] %v1212
  %s1215 = scalar_lea.vmem [#allocation4], 192
  %v1216 = vld [vmem:[%s1215] sm:$0xff]
  %v1217 = vld [vmem:[%s1215 + $0x8] sm:$0xff]
  %v1218 = vld [vmem:[%s1215 + $0x10] sm:$0xff]
  %v1219 = vld [vmem:[%s1215 + $0x18] sm:$0xff]
  %v1220 = vpack.c.bf16 %v1212, %v1212
  %1221 = vmatpush.bf16.msra.mxu0 %v712
  %1222 = vmatpush.bf16.msra.mxu0 %v708
  %1223 = vmatpush.bf16.msra.mxu0 %v704
  %1224 = vmatpush.bf16.msra.mxu0 %v700
  %1225 = vmatpush.bf16.msra.mxu0 %v696
  %1226 = vmatpush.bf16.msra.mxu0 %v692
  %1227 = vmatpush.bf16.msra.mxu0 %v688
  %1228 = vmatpush.bf16.msra.mxu0 %v684
  %1229 = vmatmul.bf16.gmra.mxu0 %v1220
  %v1230 = vpop.f32.mrf.mxu0
  %v1231 = vadd.f32 0.0, %v1230
  %v1232 = vpop.f32.mrf.mxu0
  %1233 = vdwg.mxu0
  %1234 = vmatpush.bf16.msra.mxu0 %v713
  %1235 = vmatpush.bf16.msra.mxu0 %v709
  %1236 = vmatpush.bf16.msra.mxu0 %v705
  %1237 = vmatpush.bf16.msra.mxu0 %v701
  %1238 = vmatpush.bf16.msra.mxu0 %v697
  %1239 = vmatpush.bf16.msra.mxu0 %v693
  %1240 = vmatpush.bf16.msra.mxu0 %v689
  %1241 = vmatpush.bf16.msra.mxu0 %v685
  %1242 = vmatmul.bf16.gmra.mxu0 %v1220
  %v1243 = vpop.f32.mrf.mxu0
  %v1244 = vadd.f32 0.0, %v1243
  %v1245 = vpop.f32.mrf.mxu0
  %1246 = vdwg.mxu0
  %1247 = vmatpush.bf16.msra.mxu0 %v714
  %1248 = vmatpush.bf16.msra.mxu0 %v710
  %1249 = vmatpush.bf16.msra.mxu0 %v706
  %1250 = vmatpush.bf16.msra.mxu0 %v702
  %1251 = vmatpush.bf16.msra.mxu0 %v698
  %1252 = vmatpush.bf16.msra.mxu0 %v694
  %1253 = vmatpush.bf16.msra.mxu0 %v690
  %1254 = vmatpush.bf16.msra.mxu0 %v686
  %1255 = vmatmul.bf16.gmra.mxu0 %v1220
  %v1256 = vpop.f32.mrf.mxu0
  %v1257 = vadd.f32 0.0, %v1256
  %v1258 = vpop.f32.mrf.mxu0
  %1259 = vdwg.mxu0
  %1260 = vmatpush.bf16.msra.mxu0 %v715
  %1261 = vmatpush.bf16.msra.mxu0 %v711
  %1262 = vmatpush.bf16.msra.mxu0 %v707
  %1263 = vmatpush.bf16.msra.mxu0 %v703
  %1264 = vmatpush.bf16.msra.mxu0 %v699
  %1265 = vmatpush.bf16.msra.mxu0 %v695
  %1266 = vmatpush.bf16.msra.mxu0 %v691
  %1267 = vmatpush.bf16.msra.mxu0 %v687
  %1268 = vmatmul.bf16.gmra.mxu0 %v1220
  %v1269 = vpop.f32.mrf.mxu0
  %v1270 = vadd.f32 0.0, %v1269
  %v1271 = vpop.f32.mrf.mxu0
  %1272 = vdwg.mxu0
  %v1273 = vadd.f32 %v1216, %v1231
  %v1274 = vadd.f32 %v1217, %v1244
  %v1275 = vadd.f32 %v1218, %v1257
  %v1276 = vadd.f32 %v1219, %v1270
  %v1277 = vtanh.pop %v1273
  %v1278 = vtanh.pop %v1274
  %v1279 = vtanh.pop %v1275
  %v1280 = vtanh.pop %v1276
  %v1281 = vmul.f32 %v1277, 0.5
  %v1282 = vadd.f32 %v1281, 0.5
  %v1283 = vmul.f32 %v1278, 0.5
  %v1284 = vadd.f32 %v1283, 0.5
  %v1285 = vmul.f32 %v1280, 0.5
  %v1286 = vadd.f32 %v1285, 0.5
  %v1287 = vmul.f32 %v1284, %v1210
  %v1288 = vmul.f32 %v1282, %v1279
  %v1289 = vadd.f32 %v1287, %v1288
  %v1290 = vtanh.pop %v1289
  %v1291 = vmul.f32 %v1286, %v1290
  %s1292 = scalar_lea.vmem %s4, 48
  %1293 = vst [vmem:[%s1292] sm:$0xff] %v1291
  %s1294 = scalar_lea.vmem [#allocation4], 224
  %v1295 = vld [vmem:[%s1294] sm:$0xff]
  %v1296 = vld [vmem:[%s1294 + $0x8] sm:$0xff]
  %v1297 = vld [vmem:[%s1294 + $0x10] sm:$0xff]
  %v1298 = vld [vmem:[%s1294 + $0x18] sm:$0xff]
  %v1299 = vpack.c.bf16 %v1291, %v1291
  %1300 = vmatpush.bf16.msra.mxu0 %v712
  %1301 = vmatpush.bf16.msra.mxu0 %v708
  %1302 = vmatpush.bf16.msra.mxu0 %v704
  %1303 = vmatpush.bf16.msra.mxu0 %v700
  %1304 = vmatpush.bf16.msra.mxu0 %v696
  %1305 = vmatpush.bf16.msra.mxu0 %v692
  %1306 = vmatpush.bf16.msra.mxu0 %v688
  %1307 = vmatpush.bf16.msra.mxu0 %v684
  %1308 = vmatmul.bf16.gmra.mxu0 %v1299
  %v1309 = vpop.f32.mrf.mxu0
  %v1310 = vadd.f32 0.0, %v1309
  %v1311 = vpop.f32.mrf.mxu0
  %1312 = vdwg.mxu0
  %1313 = vmatpush.bf16.msra.mxu0 %v713
  %1314 = vmatpush.bf16.msra.mxu0 %v709
  %1315 = vmatpush.bf16.msra.mxu0 %v705
  %1316 = vmatpush.bf16.msra.mxu0 %v701
  %1317 = vmatpush.bf16.msra.mxu0 %v697
  %1318 = vmatpush.bf16.msra.mxu0 %v693
  %1319 = vmatpush.bf16.msra.mxu0 %v689
  %1320 = vmatpush.bf16.msra.mxu0 %v685
  %1321 = vmatmul.bf16.gmra.mxu0 %v1299
  %v1322 = vpop.f32.mrf.mxu0
  %v1323 = vadd.f32 0.0, %v1322
  %v1324 = vpop.f32.mrf.mxu0
  %1325 = vdwg.mxu0
  %1326 = vmatpush.bf16.msra.mxu0 %v714
  %1327 = vmatpush.bf16.msra.mxu0 %v710
  %1328 = vmatpush.bf16.msra.mxu0 %v706
  %1329 = vmatpush.bf16.msra.mxu0 %v702
  %1330 = vmatpush.bf16.msra.mxu0 %v698
  %1331 = vmatpush.bf16.msra.mxu0 %v694
  %1332 = vmatpush.bf16.msra.mxu0 %v690
  %1333 = vmatpush.bf16.msra.mxu0 %v686
  %1334 = vmatmul.bf16.gmra.mxu0 %v1299
  %v1335 = vpop.f32.mrf.mxu0
  %v1336 = vadd.f32 0.0, %v1335
  %v1337 = vpop.f32.mrf.mxu0
  %1338 = vdwg.mxu0
  %1339 = vmatpush.bf16.msra.mxu0 %v715
  %1340 = vmatpush.bf16.msra.mxu0 %v711
  %1341 = vmatpush.bf16.msra.mxu0 %v707
  %1342 = vmatpush.bf16.msra.mxu0 %v703
  %1343 = vmatpush.bf16.msra.mxu0 %v699
  %1344 = vmatpush.bf16.msra.mxu0 %v695
  %1345 = vmatpush.bf16.msra.mxu0 %v691
  %1346 = vmatpush.bf16.msra.mxu0 %v687
  %1347 = vmatmul.bf16.gmra.mxu0 %v1299
  %v1348 = vpop.f32.mrf.mxu0
  %v1349 = vadd.f32 0.0, %v1348
  %v1350 = vpop.f32.mrf.mxu0
  %1351 = vdwg.mxu0
  %v1352 = vadd.f32 %v1295, %v1310
  %v1353 = vadd.f32 %v1296, %v1323
  %v1354 = vadd.f32 %v1297, %v1336
  %v1355 = vadd.f32 %v1298, %v1349
  %v1356 = vtanh.pop %v1352
  %v1357 = vtanh.pop %v1353
  %v1358 = vtanh.pop %v1354
  %v1359 = vtanh.pop %v1355
  %v1360 = vmul.f32 %v1356, 0.5
  %v1361 = vadd.f32 %v1360, 0.5
  %v1362 = vmul.f32 %v1357, 0.5
  %v1363 = vadd.f32 %v1362, 0.5
  %v1364 = vmul.f32 %v1359, 0.5
  %v1365 = vadd.f32 %v1364, 0.5
  %v1366 = vmul.f32 %v1363, %v1289
  %v1367 = vmul.f32 %v1361, %v1358
  %v1368 = vadd.f32 %v1366, %v1367
  %v1369 = vtanh.pop %v1368
  %v1370 = vmul.f32 %v1365, %v1369
  %s1371 = scalar_lea.vmem %s4, 56
  %1372 = vst [vmem:[%s1371] sm:$0xff] %v1370
  %s1373 = scalar_lea.vmem [#allocation4], 256
  %v1374 = vld [vmem:[%s1373] sm:$0xff]
  %v1375 = vld [vmem:[%s1373 + $0x8] sm:$0xff]
  %v1376 = vld [vmem:[%s1373 + $0x10] sm:$0xff]
  %v1377 = vld [vmem:[%s1373 + $0x18] sm:$0xff]
  %v1378 = vpack.c.bf16 %v1370, %v1370
  %1379 = vmatpush.bf16.msra.mxu0 %v712
  %1380 = vmatpush.bf16.msra.mxu0 %v708
  %1381 = vmatpush.bf16.msra.mxu0 %v704
  %1382 = vmatpush.bf16.msra.mxu0 %v700
  %1383 = vmatpush.bf16.msra.mxu0 %v696
  %1384 = vmatpush.bf16.msra.mxu0 %v692
  %1385 = vmatpush.bf16.msra.mxu0 %v688
  %1386 = vmatpush.bf16.msra.mxu0 %v684
  %1387 = vmatmul.bf16.gmra.mxu0 %v1378
  %v1388 = vpop.f32.mrf.mxu0
  %v1389 = vadd.f32 0.0, %v1388
  %v1390 = vpop.f32.mrf.mxu0
  %1391 = vdwg.mxu0
  %1392 = vmatpush.bf16.msra.mxu0 %v713
  %1393 = vmatpush.bf16.msra.mxu0 %v709
  %1394 = vmatpush.bf16.msra.mxu0 %v705
  %1395 = vmatpush.bf16.msra.mxu0 %v701
  %1396 = vmatpush.bf16.msra.mxu0 %v697
  %1397 = vmatpush.bf16.msra.mxu0 %v693
  %1398 = vmatpush.bf16.msra.mxu0 %v689
  %1399 = vmatpush.bf16.msra.mxu0 %v685
  %1400 = vmatmul.bf16.gmra.mxu0 %v1378
  %v1401 = vpop.f32.mrf.mxu0
  %v1402 = vadd.f32 0.0, %v1401
  %v1403 = vpop.f32.mrf.mxu0
  %1404 = vdwg.mxu0
  %1405 = vmatpush.bf16.msra.mxu0 %v714
  %1406 = vmatpush.bf16.msra.mxu0 %v710
  %1407 = vmatpush.bf16.msra.mxu0 %v706
  %1408 = vmatpush.bf16.msra.mxu0 %v702
  %1409 = vmatpush.bf16.msra.mxu0 %v698
  %1410 = vmatpush.bf16.msra.mxu0 %v694
  %1411 = vmatpush.bf16.msra.mxu0 %v690
  %1412 = vmatpush.bf16.msra.mxu0 %v686
  %1413 = vmatmul.bf16.gmra.mxu0 %v1378
  %v1414 = vpop.f32.mrf.mxu0
  %v1415 = vadd.f32 0.0, %v1414
  %v1416 = vpop.f32.mrf.mxu0
  %1417 = vdwg.mxu0
  %1418 = vmatpush.bf16.msra.mxu0 %v715
  %1419 = vmatpush.bf16.msra.mxu0 %v711
  %1420 = vmatpush.bf16.msra.mxu0 %v707
  %1421 = vmatpush.bf16.msra.mxu0 %v703
  %1422 = vmatpush.bf16.msra.mxu0 %v699
  %1423 = vmatpush.bf16.msra.mxu0 %v695
  %1424 = vmatpush.bf16.msra.mxu0 %v691
  %1425 = vmatpush.bf16.msra.mxu0 %v687
  %1426 = vmatmul.bf16.gmra.mxu0 %v1378
  %v1427 = vpop.f32.mrf.mxu0
  %v1428 = vadd.f32 0.0, %v1427
  %v1429 = vpop.f32.mrf.mxu0
  %1430 = vdwg.mxu0
  %v1431 = vadd.f32 %v1374, %v1389
  %v1432 = vadd.f32 %v1375, %v1402
  %v1433 = vadd.f32 %v1376, %v1415
  %v1434 = vadd.f32 %v1377, %v1428
  %v1435 = vtanh.pop %v1431
  %v1436 = vtanh.pop %v1432
  %v1437 = vtanh.pop %v1433
  %v1438 = vtanh.pop %v1434
  %v1439 = vmul.f32 %v1435, 0.5
  %v1440 = vadd.f32 %v1439, 0.5
  %v1441 = vmul.f32 %v1436, 0.5
  %v1442 = vadd.f32 %v1441, 0.5
  %v1443 = vmul.f32 %v1438, 0.5
  %v1444 = vadd.f32 %v1443, 0.5
  %v1445 = vmul.f32 %v1442, %v1368
  %v1446 = vmul.f32 %v1440, %v1437
  %v1447 = vadd.f32 %v1445, %v1446
  %v1448 = vtanh.pop %v1447
  %v1449 = vmul.f32 %v1444, %v1448
  %s1450 = scalar_lea.vmem %s4, 64
  %1451 = vst [vmem:[%s1450] sm:$0xff] %v1449
  %s1452 = scalar_lea.vmem [#allocation4], 288
  %v1453 = vld [vmem:[%s1452] sm:$0xff]
  %v1454 = vld [vmem:[%s1452 + $0x8] sm:$0xff]
  %v1455 = vld [vmem:[%s1452 + $0x10] sm:$0xff]
  %v1456 = vld [vmem:[%s1452 + $0x18] sm:$0xff]
  %v1457 = vpack.c.bf16 %v1449, %v1449
  %1458 = vmatpush.bf16.msra.mxu0 %v712
  %1459 = vmatpush.bf16.msra.mxu0 %v708
  %1460 = vmatpush.bf16.msra.mxu0 %v704
  %1461 = vmatpush.bf16.msra.mxu0 %v700
  %1462 = vmatpush.bf16.msra.mxu0 %v696
  %1463 = vmatpush.bf16.msra.mxu0 %v692
  %1464 = vmatpush.bf16.msra.mxu0 %v688
  %1465 = vmatpush.bf16.msra.mxu0 %v684
  %1466 = vmatmul.bf16.gmra.mxu0 %v1457
  %v1467 = vpop.f32.mrf.mxu0
  %v1468 = vadd.f32 0.0, %v1467
  %v1469 = vpop.f32.mrf.mxu0
  %1470 = vdwg.mxu0
  %1471 = vmatpush.bf16.msra.mxu0 %v713
  %1472 = vmatpush.bf16.msra.mxu0 %v709
  %1473 = vmatpush.bf16.msra.mxu0 %v705
  %1474 = vmatpush.bf16.msra.mxu0 %v701
  %1475 = vmatpush.bf16.msra.mxu0 %v697
  %1476 = vmatpush.bf16.msra.mxu0 %v693
  %1477 = vmatpush.bf16.msra.mxu0 %v689
  %1478 = vmatpush.bf16.msra.mxu0 %v685
  %1479 = vmatmul.bf16.gmra.mxu0 %v1457
  %v1480 = vpop.f32.mrf.mxu0
  %v1481 = vadd.f32 0.0, %v1480
  %v1482 = vpop.f32.mrf.mxu0
  %1483 = vdwg.mxu0
  %1484 = vmatpush.bf16.msra.mxu0 %v714
  %1485 = vmatpush.bf16.msra.mxu0 %v710
  %1486 = vmatpush.bf16.msra.mxu0 %v706
  %1487 = vmatpush.bf16.msra.mxu0 %v702
  %1488 = vmatpush.bf16.msra.mxu0 %v698
  %1489 = vmatpush.bf16.msra.mxu0 %v694
  %1490 = vmatpush.bf16.msra.mxu0 %v690
  %1491 = vmatpush.bf16.msra.mxu0 %v686
  %1492 = vmatmul.bf16.gmra.mxu0 %v1457
  %v1493 = vpop.f32.mrf.mxu0
  %v1494 = vadd.f32 0.0, %v1493
  %v1495 = vpop.f32.mrf.mxu0
  %1496 = vdwg.mxu0
  %1497 = vmatpush.bf16.msra.mxu0 %v715
  %1498 = vmatpush.bf16.msra.mxu0 %v711
  %1499 = vmatpush.bf16.msra.mxu0 %v707
  %1500 = vmatpush.bf16.msra.mxu0 %v703
  %1501 = vmatpush.bf16.msra.mxu0 %v699
  %1502 = vmatpush.bf16.msra.mxu0 %v695
  %1503 = vmatpush.bf16.msra.mxu0 %v691
  %1504 = vmatpush.bf16.msra.mxu0 %v687
  %1505 = vmatmul.bf16.gmra.mxu0 %v1457
  %v1506 = vpop.f32.mrf.mxu0
  %v1507 = vadd.f32 0.0, %v1506
  %v1508 = vpop.f32.mrf.mxu0
  %1509 = vdwg.mxu0
  %v1510 = vadd.f32 %v1453, %v1468
  %v1511 = vadd.f32 %v1454, %v1481
  %v1512 = vadd.f32 %v1455, %v1494
  %v1513 = vadd.f32 %v1456, %v1507
  %v1514 = vtanh.pop %v1510
  %v1515 = vtanh.pop %v1511
  %v1516 = vtanh.pop %v1512
  %v1517 = vtanh.pop %v1513
  %v1518 = vmul.f32 %v1514, 0.5
  %v1519 = vadd.f32 %v1518, 0.5
  %v1520 = vmul.f32 %v1515, 0.5
  %v1521 = vadd.f32 %v1520, 0.5
  %v1522 = vmul.f32 %v1517, 0.5
  %v1523 = vadd.f32 %v1522, 0.5
  %v1524 = vmul.f32 %v1521, %v1447
  %v1525 = vmul.f32 %v1519, %v1516
  %v1526 = vadd.f32 %v1524, %v1525
  %v1527 = vtanh.pop %v1526
  %v1528 = vmul.f32 %v1523, %v1527
  %s1529 = scalar_lea.vmem %s4, 72
  %1530 = vst [vmem:[%s1529] sm:$0xff] %v1528
  %s1531 = scalar_lea.vmem [#allocation4], 320
  %v1532 = vld [vmem:[%s1531] sm:$0xff]
  %v1533 = vld [vmem:[%s1531 + $0x8] sm:$0xff]
  %v1534 = vld [vmem:[%s1531 + $0x10] sm:$0xff]
  %v1535 = vld [vmem:[%s1531 + $0x18] sm:$0xff]
  %v1536 = vpack.c.bf16 %v1528, %v1528
  %1537 = vmatpush.bf16.msra.mxu0 %v712
  %1538 = vmatpush.bf16.msra.mxu0 %v708
  %1539 = vmatpush.bf16.msra.mxu0 %v704
  %1540 = vmatpush.bf16.msra.mxu0 %v700
  %1541 = vmatpush.bf16.msra.mxu0 %v696
  %1542 = vmatpush.bf16.msra.mxu0 %v692
  %1543 = vmatpush.bf16.msra.mxu0 %v688
  %1544 = vmatpush.bf16.msra.mxu0 %v684
  %1545 = vmatmul.bf16.gmra.mxu0 %v1536
  %v1546 = vpop.f32.mrf.mxu0
  %v1547 = vadd.f32 0.0, %v1546
  %v1548 = vpop.f32.mrf.mxu0
  %1549 = vdwg.mxu0
  %1550 = vmatpush.bf16.msra.mxu0 %v713
  %1551 = vmatpush.bf16.msra.mxu0 %v709
  %1552 = vmatpush.bf16.msra.mxu0 %v705
  %1553 = vmatpush.bf16.msra.mxu0 %v701
  %1554 = vmatpush.bf16.msra.mxu0 %v697
  %1555 = vmatpush.bf16.msra.mxu0 %v693
  %1556 = vmatpush.bf16.msra.mxu0 %v689
  %1557 = vmatpush.bf16.msra.mxu0 %v685
  %1558 = vmatmul.bf16.gmra.mxu0 %v1536
  %v1559 = vpop.f32.mrf.mxu0
  %v1560 = vadd.f32 0.0, %v1559
  %v1561 = vpop.f32.mrf.mxu0
  %1562 = vdwg.mxu0
  %1563 = vmatpush.bf16.msra.mxu0 %v714
  %1564 = vmatpush.bf16.msra.mxu0 %v710
  %1565 = vmatpush.bf16.msra.mxu0 %v706
  %1566 = vmatpush.bf16.msra.mxu0 %v702
  %1567 = vmatpush.bf16.msra.mxu0 %v698
  %1568 = vmatpush.bf16.msra.mxu0 %v694
  %1569 = vmatpush.bf16.msra.mxu0 %v690
  %1570 = vmatpush.bf16.msra.mxu0 %v686
  %1571 = vmatmul.bf16.gmra.mxu0 %v1536
  %v1572 = vpop.f32.mrf.mxu0
  %v1573 = vadd.f32 0.0, %v1572
  %v1574 = vpop.f32.mrf.mxu0
  %1575 = vdwg.mxu0
  %1576 = vmatpush.bf16.msra.mxu0 %v715
  %1577 = vmatpush.bf16.msra.mxu0 %v711
  %1578 = vmatpush.bf16.msra.mxu0 %v707
  %1579 = vmatpush.bf16.msra.mxu0 %v703
  %1580 = vmatpush.bf16.msra.mxu0 %v699
  %1581 = vmatpush.bf16.msra.mxu0 %v695
  %1582 = vmatpush.bf16.msra.mxu0 %v691
  %1583 = vmatpush.bf16.msra.mxu0 %v687
  %1584 = vmatmul.bf16.gmra.mxu0 %v1536
  %v1585 = vpop.f32.mrf.mxu0
  %v1586 = vadd.f32 0.0, %v1585
  %v1587 = vpop.f32.mrf.mxu0
  %1588 = vdwg.mxu0
  %v1589 = vadd.f32 %v1532, %v1547
  %v1590 = vadd.f32 %v1533, %v1560
  %v1591 = vadd.f32 %v1534, %v1573
  %v1592 = vadd.f32 %v1535, %v1586
  %v1593 = vtanh.pop %v1589
  %v1594 = vtanh.pop %v1590
  %v1595 = vtanh.pop %v1591
  %v1596 = vtanh.pop %v1592
  %v1597 = vmul.f32 %v1593, 0.5
  %v1598 = vadd.f32 %v1597, 0.5
  %v1599 = vmul.f32 %v1594, 0.5
  %v1600 = vadd.f32 %v1599, 0.5
  %v1601 = vmul.f32 %v1596, 0.5
  %v1602 = vadd.f32 %v1601, 0.5
  %v1603 = vmul.f32 %v1600, %v1526
  %v1604 = vmul.f32 %v1598, %v1595
  %v1605 = vadd.f32 %v1603, %v1604
  %v1606 = vtanh.pop %v1605
  %v1607 = vmul.f32 %v1602, %v1606
  %s1608 = scalar_lea.vmem %s4, 80
  %1609 = vst [vmem:[%s1608] sm:$0xff] %v1607
  %s1610 = scalar_lea.vmem [#allocation4], 352
  %v1611 = vld [vmem:[%s1610] sm:$0xff]
  %v1612 = vld [vmem:[%s1610 + $0x8] sm:$0xff]
  %v1613 = vld [vmem:[%s1610 + $0x10] sm:$0xff]
  %v1614 = vld [vmem:[%s1610 + $0x18] sm:$0xff]
  %v1615 = vpack.c.bf16 %v1607, %v1607
  %1616 = vmatpush.bf16.msra.mxu0 %v712
  %1617 = vmatpush.bf16.msra.mxu0 %v708
  %1618 = vmatpush.bf16.msra.mxu0 %v704
  %1619 = vmatpush.bf16.msra.mxu0 %v700
  %1620 = vmatpush.bf16.msra.mxu0 %v696
  %1621 = vmatpush.bf16.msra.mxu0 %v692
  %1622 = vmatpush.bf16.msra.mxu0 %v688
  %1623 = vmatpush.bf16.msra.mxu0 %v684
  %1624 = vmatmul.bf16.gmra.mxu0 %v1615
  %v1625 = vpop.f32.mrf.mxu0
  %v1626 = vadd.f32 0.0, %v1625
  %v1627 = vpop.f32.mrf.mxu0
  %1628 = vdwg.mxu0
  %1629 = vmatpush.bf16.msra.mxu0 %v713
  %1630 = vmatpush.bf16.msra.mxu0 %v709
  %1631 = vmatpush.bf16.msra.mxu0 %v705
  %1632 = vmatpush.bf16.msra.mxu0 %v701
  %1633 = vmatpush.bf16.msra.mxu0 %v697
  %1634 = vmatpush.bf16.msra.mxu0 %v693
  %1635 = vmatpush.bf16.msra.mxu0 %v689
  %1636 = vmatpush.bf16.msra.mxu0 %v685
  %1637 = vmatmul.bf16.gmra.mxu0 %v1615
  %v1638 = vpop.f32.mrf.mxu0
  %v1639 = vadd.f32 0.0, %v1638
  %v1640 = vpop.f32.mrf.mxu0
  %1641 = vdwg.mxu0
  %1642 = vmatpush.bf16.msra.mxu0 %v714
  %1643 = vmatpush.bf16.msra.mxu0 %v710
  %1644 = vmatpush.bf16.msra.mxu0 %v706
  %1645 = vmatpush.bf16.msra.mxu0 %v702
  %1646 = vmatpush.bf16.msra.mxu0 %v698
  %1647 = vmatpush.bf16.msra.mxu0 %v694
  %1648 = vmatpush.bf16.msra.mxu0 %v690
  %1649 = vmatpush.bf16.msra.mxu0 %v686
  %1650 = vmatmul.bf16.gmra.mxu0 %v1615
  %v1651 = vpop.f32.mrf.mxu0
  %v1652 = vadd.f32 0.0, %v1651
  %v1653 = vpop.f32.mrf.mxu0
  %1654 = vdwg.mxu0
  %1655 = vmatpush.bf16.msra.mxu0 %v715
  %1656 = vmatpush.bf16.msra.mxu0 %v711
  %1657 = vmatpush.bf16.msra.mxu0 %v707
  %1658 = vmatpush.bf16.msra.mxu0 %v703
  %1659 = vmatpush.bf16.msra.mxu0 %v699
  %1660 = vmatpush.bf16.msra.mxu0 %v695
  %1661 = vmatpush.bf16.msra.mxu0 %v691
  %1662 = vmatpush.bf16.msra.mxu0 %v687
  %1663 = vmatmul.bf16.gmra.mxu0 %v1615
  %v1664 = vpop.f32.mrf.mxu0
  %v1665 = vadd.f32 0.0, %v1664
  %v1666 = vpop.f32.mrf.mxu0
  %1667 = vdwg.mxu0
  %v1668 = vadd.f32 %v1611, %v1626
  %v1669 = vadd.f32 %v1612, %v1639
  %v1670 = vadd.f32 %v1613, %v1652
  %v1671 = vadd.f32 %v1614, %v1665
  %v1672 = vtanh.pop %v1668
  %v1673 = vtanh.pop %v1669
  %v1674 = vtanh.pop %v1670
  %v1675 = vtanh.pop %v1671
  %v1676 = vmul.f32 %v1672, 0.5
  %v1677 = vadd.f32 %v1676, 0.5
  %v1678 = vmul.f32 %v1673, 0.5
  %v1679 = vadd.f32 %v1678, 0.5
  %v1680 = vmul.f32 %v1675, 0.5
  %v1681 = vadd.f32 %v1680, 0.5
  %v1682 = vmul.f32 %v1679, %v1605
  %v1683 = vmul.f32 %v1677, %v1674
  %v1684 = vadd.f32 %v1682, %v1683
  %v1685 = vtanh.pop %v1684
  %v1686 = vmul.f32 %v1681, %v1685
  %s1687 = scalar_lea.vmem %s4, 88
  %1688 = vst [vmem:[%s1687] sm:$0xff] %v1686
  %s1689 = scalar_lea.vmem [#allocation4], 384
  %v1690 = vld [vmem:[%s1689] sm:$0xff]
  %v1691 = vld [vmem:[%s1689 + $0x8] sm:$0xff]
  %v1692 = vld [vmem:[%s1689 + $0x10] sm:$0xff]
  %v1693 = vld [vmem:[%s1689 + $0x18] sm:$0xff]
  %v1694 = vpack.c.bf16 %v1686, %v1686
  %1695 = vmatpush.bf16.msra.mxu0 %v712
  %1696 = vmatpush.bf16.msra.mxu0 %v708
  %1697 = vmatpush.bf16.msra.mxu0 %v704
  %1698 = vmatpush.bf16.msra.mxu0 %v700
  %1699 = vmatpush.bf16.msra.mxu0 %v696
  %1700 = vmatpush.bf16.msra.mxu0 %v692
  %1701 = vmatpush.bf16.msra.mxu0 %v688
  %1702 = vmatpush.bf16.msra.mxu0 %v684
  %1703 = vmatmul.bf16.gmra.mxu0 %v1694
  %v1704 = vpop.f32.mrf.mxu0
  %v1705 = vadd.f32 0.0, %v1704
  %v1706 = vpop.f32.mrf.mxu0
  %1707 = vdwg.mxu0
  %1708 = vmatpush.bf16.msra.mxu0 %v713
  %1709 = vmatpush.bf16.msra.mxu0 %v709
  %1710 = vmatpush.bf16.msra.mxu0 %v705
  %1711 = vmatpush.bf16.msra.mxu0 %v701
  %1712 = vmatpush.bf16.msra.mxu0 %v697
  %1713 = vmatpush.bf16.msra.mxu0 %v693
  %1714 = vmatpush.bf16.msra.mxu0 %v689
  %1715 = vmatpush.bf16.msra.mxu0 %v685
  %1716 = vmatmul.bf16.gmra.mxu0 %v1694
  %v1717 = vpop.f32.mrf.mxu0
  %v1718 = vadd.f32 0.0, %v1717
  %v1719 = vpop.f32.mrf.mxu0
  %1720 = vdwg.mxu0
  %1721 = vmatpush.bf16.msra.mxu0 %v714
  %1722 = vmatpush.bf16.msra.mxu0 %v710
  %1723 = vmatpush.bf16.msra.mxu0 %v706
  %1724 = vmatpush.bf16.msra.mxu0 %v702
  %1725 = vmatpush.bf16.msra.mxu0 %v698
  %1726 = vmatpush.bf16.msra.mxu0 %v694
  %1727 = vmatpush.bf16.msra.mxu0 %v690
  %1728 = vmatpush.bf16.msra.mxu0 %v686
  %1729 = vmatmul.bf16.gmra.mxu0 %v1694
  %v1730 = vpop.f32.mrf.mxu0
  %v1731 = vadd.f32 0.0, %v1730
  %v1732 = vpop.f32.mrf.mxu0
  %1733 = vdwg.mxu0
  %1734 = vmatpush.bf16.msra.mxu0 %v715
  %1735 = vmatpush.bf16.msra.mxu0 %v711
  %1736 = vmatpush.bf16.msra.mxu0 %v707
  %1737 = vmatpush.bf16.msra.mxu0 %v703
  %1738 = vmatpush.bf16.msra.mxu0 %v699
  %1739 = vmatpush.bf16.msra.mxu0 %v695
  %1740 = vmatpush.bf16.msra.mxu0 %v691
  %1741 = vmatpush.bf16.msra.mxu0 %v687
  %1742 = vmatmul.bf16.gmra.mxu0 %v1694
  %v1743 = vpop.f32.mrf.mxu0
  %v1744 = vadd.f32 0.0, %v1743
  %v1745 = vpop.f32.mrf.mxu0
  %1746 = vdwg.mxu0
  %v1747 = vadd.f32 %v1690, %v1705
  %v1748 = vadd.f32 %v1691, %v1718
  %v1749 = vadd.f32 %v1692, %v1731
  %v1750 = vadd.f32 %v1693, %v1744
  %v1751 = vtanh.pop %v1747
  %v1752 = vtanh.pop %v1748
  %v1753 = vtanh.pop %v1749
  %v1754 = vtanh.pop %v1750
  %v1755 = vmul.f32 %v1751, 0.5
  %v1756 = vadd.f32 %v1755, 0.5
  %v1757 = vmul.f32 %v1752, 0.5
  %v1758 = vadd.f32 %v1757, 0.5
  %v1759 = vmul.f32 %v1754, 0.5
  %v1760 = vadd.f32 %v1759, 0.5
  %v1761 = vmul.f32 %v1758, %v1684
  %v1762 = vmul.f32 %v1756, %v1753
  %v1763 = vadd.f32 %v1761, %v1762
  %v1764 = vtanh.pop %v1763
  %v1765 = vmul.f32 %v1760, %v1764
  %s1766 = scalar_lea.vmem %s4, 96
  %1767 = vst [vmem:[%s1766] sm:$0xff] %v1765
  %s1768 = scalar_lea.vmem [#allocation4], 416
  %v1769 = vld [vmem:[%s1768] sm:$0xff]
  %v1770 = vld [vmem:[%s1768 + $0x8] sm:$0xff]
  %v1771 = vld [vmem:[%s1768 + $0x10] sm:$0xff]
  %v1772 = vld [vmem:[%s1768 + $0x18] sm:$0xff]
  %v1773 = vpack.c.bf16 %v1765, %v1765
  %1774 = vmatpush.bf16.msra.mxu0 %v712
  %1775 = vmatpush.bf16.msra.mxu0 %v708
  %1776 = vmatpush.bf16.msra.mxu0 %v704
  %1777 = vmatpush.bf16.msra.mxu0 %v700
  %1778 = vmatpush.bf16.msra.mxu0 %v696
  %1779 = vmatpush.bf16.msra.mxu0 %v692
  %1780 = vmatpush.bf16.msra.mxu0 %v688
  %1781 = vmatpush.bf16.msra.mxu0 %v684
  %1782 = vmatmul.bf16.gmra.mxu0 %v1773
  %v1783 = vpop.f32.mrf.mxu0
  %v1784 = vadd.f32 0.0, %v1783
  %v1785 = vpop.f32.mrf.mxu0
  %1786 = vdwg.mxu0
  %1787 = vmatpush.bf16.msra.mxu0 %v713
  %1788 = vmatpush.bf16.msra.mxu0 %v709
  %1789 = vmatpush.bf16.msra.mxu0 %v705
  %1790 = vmatpush.bf16.msra.mxu0 %v701
  %1791 = vmatpush.bf16.msra.mxu0 %v697
  %1792 = vmatpush.bf16.msra.mxu0 %v693
  %1793 = vmatpush.bf16.msra.mxu0 %v689
  %1794 = vmatpush.bf16.msra.mxu0 %v685
  %1795 = vmatmul.bf16.gmra.mxu0 %v1773
  %v1796 = vpop.f32.mrf.mxu0
  %v1797 = vadd.f32 0.0, %v1796
  %v1798 = vpop.f32.mrf.mxu0
  %1799 = vdwg.mxu0
  %1800 = vmatpush.bf16.msra.mxu0 %v714
  %1801 = vmatpush.bf16.msra.mxu0 %v710
  %1802 = vmatpush.bf16.msra.mxu0 %v706
  %1803 = vmatpush.bf16.msra.mxu0 %v702
  %1804 = vmatpush.bf16.msra.mxu0 %v698
  %1805 = vmatpush.bf16.msra.mxu0 %v694
  %1806 = vmatpush.bf16.msra.mxu0 %v690
  %1807 = vmatpush.bf16.msra.mxu0 %v686
  %1808 = vmatmul.bf16.gmra.mxu0 %v1773
  %v1809 = vpop.f32.mrf.mxu0
  %v1810 = vadd.f32 0.0, %v1809
  %v1811 = vpop.f32.mrf.mxu0
  %1812 = vdwg.mxu0
  %1813 = vmatpush.bf16.msra.mxu0 %v715
  %1814 = vmatpush.bf16.msra.mxu0 %v711
  %1815 = vmatpush.bf16.msra.mxu0 %v707
  %1816 = vmatpush.bf16.msra.mxu0 %v703
  %1817 = vmatpush.bf16.msra.mxu0 %v699
  %1818 = vmatpush.bf16.msra.mxu0 %v695
  %1819 = vmatpush.bf16.msra.mxu0 %v691
  %1820 = vmatpush.bf16.msra.mxu0 %v687
  %1821 = vmatmul.bf16.gmra.mxu0 %v1773
  %v1822 = vpop.f32.mrf.mxu0
  %v1823 = vadd.f32 0.0, %v1822
  %v1824 = vpop.f32.mrf.mxu0
  %1825 = vdwg.mxu0
  %v1826 = vadd.f32 %v1769, %v1784
  %v1827 = vadd.f32 %v1770, %v1797
  %v1828 = vadd.f32 %v1771, %v1810
  %v1829 = vadd.f32 %v1772, %v1823
  %v1830 = vtanh.pop %v1826
  %v1831 = vtanh.pop %v1827
  %v1832 = vtanh.pop %v1828
  %v1833 = vtanh.pop %v1829
  %v1834 = vmul.f32 %v1830, 0.5
  %v1835 = vadd.f32 %v1834, 0.5
  %v1836 = vmul.f32 %v1831, 0.5
  %v1837 = vadd.f32 %v1836, 0.5
  %v1838 = vmul.f32 %v1833, 0.5
  %v1839 = vadd.f32 %v1838, 0.5
  %v1840 = vmul.f32 %v1837, %v1763
  %v1841 = vmul.f32 %v1835, %v1832
  %v1842 = vadd.f32 %v1840, %v1841
  %v1843 = vtanh.pop %v1842
  %v1844 = vmul.f32 %v1839, %v1843
  %s1845 = scalar_lea.vmem %s4, 104
  %1846 = vst [vmem:[%s1845] sm:$0xff] %v1844
  %s1847 = scalar_lea.vmem [#allocation4], 448
  %v1848 = vld [vmem:[%s1847] sm:$0xff]
  %v1849 = vld [vmem:[%s1847 + $0x8] sm:$0xff]
  %v1850 = vld [vmem:[%s1847 + $0x10] sm:$0xff]
  %v1851 = vld [vmem:[%s1847 + $0x18] sm:$0xff]
  %v1852 = vpack.c.bf16 %v1844, %v1844
  %1853 = vmatpush.bf16.msra.mxu0 %v712
  %1854 = vmatpush.bf16.msra.mxu0 %v708
  %1855 = vmatpush.bf16.msra.mxu0 %v704
  %1856 = vmatpush.bf16.msra.mxu0 %v700
  %1857 = vmatpush.bf16.msra.mxu0 %v696
  %1858 = vmatpush.bf16.msra.mxu0 %v692
  %1859 = vmatpush.bf16.msra.mxu0 %v688
  %1860 = vmatpush.bf16.msra.mxu0 %v684
  %1861 = vmatmul.bf16.gmra.mxu0 %v1852
  %v1862 = vpop.f32.mrf.mxu0
  %v1863 = vadd.f32 0.0, %v1862
  %v1864 = vpop.f32.mrf.mxu0
  %1865 = vdwg.mxu0
  %1866 = vmatpush.bf16.msra.mxu0 %v713
  %1867 = vmatpush.bf16.msra.mxu0 %v709
  %1868 = vmatpush.bf16.msra.mxu0 %v705
  %1869 = vmatpush.bf16.msra.mxu0 %v701
  %1870 = vmatpush.bf16.msra.mxu0 %v697
  %1871 = vmatpush.bf16.msra.mxu0 %v693
  %1872 = vmatpush.bf16.msra.mxu0 %v689
  %1873 = vmatpush.bf16.msra.mxu0 %v685
  %1874 = vmatmul.bf16.gmra.mxu0 %v1852
  %v1875 = vpop.f32.mrf.mxu0
  %v1876 = vadd.f32 0.0, %v1875
  %v1877 = vpop.f32.mrf.mxu0
  %1878 = vdwg.mxu0
  %1879 = vmatpush.bf16.msra.mxu0 %v714
  %1880 = vmatpush.bf16.msra.mxu0 %v710
  %1881 = vmatpush.bf16.msra.mxu0 %v706
  %1882 = vmatpush.bf16.msra.mxu0 %v702
  %1883 = vmatpush.bf16.msra.mxu0 %v698
  %1884 = vmatpush.bf16.msra.mxu0 %v694
  %1885 = vmatpush.bf16.msra.mxu0 %v690
  %1886 = vmatpush.bf16.msra.mxu0 %v686
  %1887 = vmatmul.bf16.gmra.mxu0 %v1852
  %v1888 = vpop.f32.mrf.mxu0
  %v1889 = vadd.f32 0.0, %v1888
  %v1890 = vpop.f32.mrf.mxu0
  %1891 = vdwg.mxu0
  %1892 = vmatpush.bf16.msra.mxu0 %v715
  %1893 = vmatpush.bf16.msra.mxu0 %v711
  %1894 = vmatpush.bf16.msra.mxu0 %v707
  %1895 = vmatpush.bf16.msra.mxu0 %v703
  %1896 = vmatpush.bf16.msra.mxu0 %v699
  %1897 = vmatpush.bf16.msra.mxu0 %v695
  %1898 = vmatpush.bf16.msra.mxu0 %v691
  %1899 = vmatpush.bf16.msra.mxu0 %v687
  %1900 = vmatmul.bf16.gmra.mxu0 %v1852
  %v1901 = vpop.f32.mrf.mxu0
  %v1902 = vadd.f32 0.0, %v1901
  %v1903 = vpop.f32.mrf.mxu0
  %1904 = vdwg.mxu0
  %v1905 = vadd.f32 %v1848, %v1863
  %v1906 = vadd.f32 %v1849, %v1876
  %v1907 = vadd.f32 %v1850, %v1889
  %v1908 = vadd.f32 %v1851, %v1902
  %v1909 = vtanh.pop %v1905
  %v1910 = vtanh.pop %v1906
  %v1911 = vtanh.pop %v1907
  %v1912 = vtanh.pop %v1908
  %v1913 = vmul.f32 %v1909, 0.5
  %v1914 = vadd.f32 %v1913, 0.5
  %v1915 = vmul.f32 %v1910, 0.5
  %v1916 = vadd.f32 %v1915, 0.5
  %v1917 = vmul.f32 %v1912, 0.5
  %v1918 = vadd.f32 %v1917, 0.5
  %v1919 = vmul.f32 %v1916, %v1842
  %v1920 = vmul.f32 %v1914, %v1911
  %v1921 = vadd.f32 %v1919, %v1920
  %v1922 = vtanh.pop %v1921
  %v1923 = vmul.f32 %v1918, %v1922
  %s1924 = scalar_lea.vmem %s4, 112
  %1925 = vst [vmem:[%s1924] sm:$0xff] %v1923
  %s1926 = scalar_lea.vmem [#allocation4], 480
  %v1927 = vld [vmem:[%s1926] sm:$0xff]
  %v1928 = vld [vmem:[%s1926 + $0x8] sm:$0xff]
  %v1929 = vld [vmem:[%s1926 + $0x10] sm:$0xff]
  %v1930 = vld [vmem:[%s1926 + $0x18] sm:$0xff]
  %v1931 = vpack.c.bf16 %v1923, %v1923
  %1932 = vmatpush.bf16.msra.mxu0 %v712
  %1933 = vmatpush.bf16.msra.mxu0 %v708
  %1934 = vmatpush.bf16.msra.mxu0 %v704
  %1935 = vmatpush.bf16.msra.mxu0 %v700
  %1936 = vmatpush.bf16.msra.mxu0 %v696
  %1937 = vmatpush.bf16.msra.mxu0 %v692
  %1938 = vmatpush.bf16.msra.mxu0 %v688
  %1939 = vmatpush.bf16.msra.mxu0 %v684
  %1940 = vmatmul.bf16.gmra.mxu0 %v1931
  %v1941 = vpop.f32.mrf.mxu0
  %v1942 = vadd.f32 0.0, %v1941
  %v1943 = vpop.f32.mrf.mxu0
  %1944 = vdwg.mxu0
  %1945 = vmatpush.bf16.msra.mxu0 %v713
  %1946 = vmatpush.bf16.msra.mxu0 %v709
  %1947 = vmatpush.bf16.msra.mxu0 %v705
  %1948 = vmatpush.bf16.msra.mxu0 %v701
  %1949 = vmatpush.bf16.msra.mxu0 %v697
  %1950 = vmatpush.bf16.msra.mxu0 %v693
  %1951 = vmatpush.bf16.msra.mxu0 %v689
  %1952 = vmatpush.bf16.msra.mxu0 %v685
  %1953 = vmatmul.bf16.gmra.mxu0 %v1931
  %v1954 = vpop.f32.mrf.mxu0
  %v1955 = vadd.f32 0.0, %v1954
  %v1956 = vpop.f32.mrf.mxu0
  %1957 = vdwg.mxu0
  %1958 = vmatpush.bf16.msra.mxu0 %v714
  %1959 = vmatpush.bf16.msra.mxu0 %v710
  %1960 = vmatpush.bf16.msra.mxu0 %v706
  %1961 = vmatpush.bf16.msra.mxu0 %v702
  %1962 = vmatpush.bf16.msra.mxu0 %v698
  %1963 = vmatpush.bf16.msra.mxu0 %v694
  %1964 = vmatpush.bf16.msra.mxu0 %v690
  %1965 = vmatpush.bf16.msra.mxu0 %v686
  %1966 = vmatmul.bf16.gmra.mxu0 %v1931
  %v1967 = vpop.f32.mrf.mxu0
  %v1968 = vadd.f32 0.0, %v1967
  %v1969 = vpop.f32.mrf.mxu0
  %1970 = vdwg.mxu0
  %1971 = vmatpush.bf16.msra.mxu0 %v715
  %1972 = vmatpush.bf16.msra.mxu0 %v711
  %1973 = vmatpush.bf16.msra.mxu0 %v707
  %1974 = vmatpush.bf16.msra.mxu0 %v703
  %1975 = vmatpush.bf16.msra.mxu0 %v699
  %1976 = vmatpush.bf16.msra.mxu0 %v695
  %1977 = vmatpush.bf16.msra.mxu0 %v691
  %1978 = vmatpush.bf16.msra.mxu0 %v687
  %1979 = vmatmul.bf16.gmra.mxu0 %v1931
  %v1980 = vpop.f32.mrf.mxu0
  %v1981 = vadd.f32 0.0, %v1980
  %v1982 = vpop.f32.mrf.mxu0
  %1983 = vdwg.mxu0
  %v1984 = vadd.f32 %v1927, %v1942
  %v1985 = vadd.f32 %v1928, %v1955
  %v1986 = vadd.f32 %v1929, %v1968
  %v1987 = vadd.f32 %v1930, %v1981
  %v1988 = vtanh.pop %v1984
  %v1989 = vtanh.pop %v1985
  %v1990 = vtanh.pop %v1986
  %v1991 = vtanh.pop %v1987
  %v1992 = vmul.f32 %v1988, 0.5
  %v1993 = vadd.f32 %v1992, 0.5
  %v1994 = vmul.f32 %v1989, 0.5
  %v1995 = vadd.f32 %v1994, 0.5
  %v1996 = vmul.f32 %v1991, 0.5
  %v1997 = vadd.f32 %v1996, 0.5
  %v1998 = vmul.f32 %v1995, %v1921
  %v1999 = vmul.f32 %v1993, %v1990
  %v2000 = vadd.f32 %v1998, %v1999
  %v2001 = vtanh.pop %v2000
  %v2002 = vmul.f32 %v1997, %v2001
  %s2003 = scalar_lea.vmem %s4, 120
  %2004 = vst [vmem:[%s2003] sm:$0xff] %v2002
  %2005 = vst [vmem:[#allocation2] sm:$0xff] %v2002
  %2006 = vst [vmem:[#allocation3] sm:$0xff] %v2000
  // Predicated region
  $region22: #{lstm_forward.1} parent=0 // pred_check
    _
  $region23: #{lstm_forward.1} parent=0 // pred_check_branch
    %2008 = sbr.rel (0) target = $region25
  $region24: #{lstm_forward.1} parent=0 // pred_region
    _
  $region25: #{lstm_forward.1} parent=0 // pred_fallthru
    _
  // Predicated region
  $region26: #{lstm_forward.1} parent=0 // pred_check
    _
  $region27: #{lstm_forward.1} parent=0 // pred_check_branch
    %2010 = sbr.rel (0) target = $region29
  $region28: #{lstm_forward.1} parent=0 // pred_region
    _
  $region29: #{lstm_forward.1} parent=0 // pred_fallthru
    _

</llo_original>
